<compile_context>
chip_gen: v7x
topology: tpu7x:2x2x1
jax: 0.10.0
libtpu: 0.0.40
codegen_flags: <defaults>
</compile_context>

<pallas_src>
import functools

import numpy as np
import jax
import jax.numpy as jnp
from jax.experimental import pallas as pl
from jax.experimental.pallas import tpu as pltpu


# ----------------------------------------------------------------------------
# Fused Pallas kernel
# ----------------------------------------------------------------------------
def _fused_decode_kernel(x_ref, w1_ref, b1_ref, w2_ref, b2_ref, wc_ref, bc_ref,
                         bil_ref, o_ref, zmat_ref, *, group, p1):
    """One group of `group` images.

    x_ref   : (1, p1*group, C0)   rows ordered (input-pixel ij, image n)
    w1_ref  : (C0, 4*C1)          deconv1, cols = (p1q1, c1)
    w2_ref  : (4*C1, 16*C2)       deconv2, block-diag over p1q1, cols = (p1q1, p2q2, c2)
    wc_ref  : (16*C2, 16)         1x1 conv, block-diag over sub-pixel s = (p1q1p2q2)
    bil_ref : (p1*16, Hout*Wout)  bilinear 2x upsample + sub-pixel unscramble
    o_ref   : (1, group, Hout*Wout)
    zmat_ref: (group, p1*16)      VMEM scratch: rows = images, cols = (ij, s)
    """
    x = x_ref[0]                                                    # (p1*G, C0)

    # deconv1: per-pixel matmul + bias + leaky_relu(0.1)
    y = jnp.dot(x, w1_ref[...], preferred_element_type=jnp.float32) + b1_ref[...]
    y = jnp.where(y >= 0.0, y, 0.1 * y)                             # (p1*G, 4*C1)

    # deconv2: block-diagonal over the 4 stage-1 sub-pixels
    y = jnp.dot(y, w2_ref[...], preferred_element_type=jnp.float32) + b2_ref[...]
    y = jnp.where(y >= 0.0, y, 0.1 * y)                             # (p1*G, 16*C2)

    # 1x1 conv + sigmoid: block-diagonal over the 16 sub-pixels
    z = jnp.dot(y, wc_ref[...], preferred_element_type=jnp.float32) + bc_ref[...]
    z = jax.nn.sigmoid(z)                                           # (p1*G, 16)

    # Regroup in VMEM: zmat[n, ij*16 + s] = z[ij*group + n, s]
    # (static slice copies only; never touches HBM)
    for ij in range(p1):
        zmat_ref[:, ij * 16:(ij + 1) * 16] = z[ij * group:(ij + 1) * group, :]

    # Bilinear 2x upsample + spatial unscramble as one lane-dense matmul.
    o_ref[0] = jnp.dot(zmat_ref[...], bil_ref[...],
                       preferred_element_type=jnp.float32).astype(o_ref.dtype)


# ----------------------------------------------------------------------------
# Trace-time weight / matrix construction
# ----------------------------------------------------------------------------
def _bilinear_matrix_np(n_in):
    """1-D interpolation matrix matching F.interpolate(mode='bilinear',
    align_corners=False) for an exact 2x upsample."""
    n_out = 2 * n_in
    o = np.arange(n_out)
    src = np.maximum((o + 0.5) * 0.5 - 0.5, 0.0)
    i0 = np.minimum(np.floor(src).astype(np.int64), n_in - 1)
    i1 = np.minimum(i0 + 1, n_in - 1)
    w1 = (src - i0).astype(np.float32)
    w0 = 1.0 - w1
    A = np.zeros((n_out, n_in), np.float32)
    A[o, i0] += w0
    A[o, i1] += w1
    return A


def _bilinear_unscramble_matrix(h, w):
    """(h*w*16, 64*h*w) matrix mapping the scrambled sub-pixel layout
    (columns ordered (i, j, p1, q1, p2, q2)) to the flattened bilinearly
    2x-upsampled output (row-major (p, q) over an (8h, 8w) image)."""
    Hm, Wm = 4 * h, 4 * w                      # spatial size after the two deconvs
    Ah = _bilinear_matrix_np(Hm)               # (2*Hm, Hm)
    Aw = _bilinear_matrix_np(Wm)               # (2*Wm, Wm)
    i, j, p1, q1, p2, q2 = np.meshgrid(
        np.arange(h), np.arange(w), np.arange(2), np.arange(2),
        np.arange(2), np.arange(2), indexing="ij")
    rows = ((i * w + j) * 16 + p1 * 8 + q1 * 4 + p2 * 2 + q2).reshape(-1)
    r_src = (4 * i + 2 * p1 + p2).reshape(-1)  # row in the pre-upsample image
    c_src = (4 * j + 2 * q1 + q2).reshape(-1)  # col in the pre-upsample image
    outer = Ah[:, r_src].T[:, :, None] * Aw[:, c_src].T[:, None, :]  # (K, 2Hm, 2Wm)
    B = np.zeros((h * w * 16, 2 * Hm * 2 * Wm), np.float32)
    B[rows] = outer.reshape(rows.size, -1)
    return jnp.asarray(B)


def _pick_group_size(nimg):
    """Largest divisor of nimg giving >=2 grid steps (v7x megacore) and a
    bounded per-step VMEM footprint."""
    cap = max(1, min(nimg // 2, 64))
    for g in range(cap, 0, -1):
        if nimg % g == 0:
            return g
    return 1


# ----------------------------------------------------------------------------
# Module: parameters + forward
# ----------------------------------------------------------------------------
def init_params(key, hidden_channels):
    c0, c1, c2 = hidden_channels
    ks = jax.random.split(key, 6)
    s = 0.1
    return {
        # ConvTranspose2d weight layout: (in_ch, out_ch, kH, kW)
        "W1": s * jax.random.normal(ks[0], (c0, c1, 2, 2), jnp.float32),
        "b1": s * jax.random.normal(ks[1], (c1,), jnp.float32),
        "W2": s * jax.random.normal(ks[2], (c1, c2, 2, 2), jnp.float32),
        "b2": s * jax.random.normal(ks[3], (c2,), jnp.float32),
        # Conv2d weight layout: (out_ch, in_ch, 1, 1)
        "Wc": s * jax.random.normal(ks[4], (1, c2, 1, 1), jnp.float32),
        "bc": s * jax.random.normal(ks[5], (1,), jnp.float32),
    }


def feature_decoding_forward(x, params):
    """x: (B, L, C0, H/8, W/8) float32  ->  (B, L, 1, H, W) float32."""
    B, L, C0, h, w = x.shape
    Nimg = B * L
    P1 = h * w
    G = _pick_group_size(Nimg)
    ngroups = Nimg // G
    Hout, Wout = 8 * h, 8 * w

    C1 = params["W1"].shape[1]
    C2 = params["W2"].shape[1]

    # ---- fold module weights into the fused per-pixel matmul chain ----------
    # deconv1: cols (p1, q1, c1)
    W1f = params["W1"].transpose(0, 2, 3, 1).reshape(C0, 4 * C1)
    b1f = jnp.tile(params["b1"], 4).reshape(1, 4 * C1)
    # deconv2: block-diagonal over the 4 (p1, q1) sub-pixels
    W2f = params["W2"].transpose(0, 2, 3, 1).reshape(C1, 4 * C2)
    W2big = jnp.kron(jnp.eye(4, dtype=W2f.dtype), W2f)           # (4*C1, 16*C2)
    b2f = jnp.tile(params["b2"], 16).reshape(1, 16 * C2)
    # 1x1 conv: block-diagonal over the 16 (p1, q1, p2, q2) sub-pixels
    Wc = params["Wc"].reshape(1, C2).T                           # (C2, 1)
    Wcbig = jnp.kron(jnp.eye(16, dtype=Wc.dtype), Wc)            # (16*C2, 16)
    bcf = jnp.broadcast_to(params["bc"].reshape(1, 1), (1, 16))
    # bilinear 2x upsample + unscramble (built in numpy at trace time)
    Bmat = _bilinear_unscramble_matrix(h, w)                     # (P1*16, Hout*Wout)

    # ---- input layout: rows = (group, pixel ij, image-in-group), cols = C0 --
    xr = x.reshape(ngroups, G, C0, P1)
    xr = xr.transpose(0, 3, 1, 2).reshape(ngroups, P1 * G, C0)

    out = pl.pallas_call(
        functools.partial(_fused_decode_kernel, group=G, p1=P1),
        out_shape=jax.ShapeDtypeStruct((ngroups, G, Hout * Wout), x.dtype),
        grid_spec=pltpu.PrefetchScalarGridSpec(
            num_scalar_prefetch=0,
            grid=(ngroups,),
            in_specs=[
                pl.BlockSpec((1, P1 * G, C0), lambda g: (g, 0, 0)),
                pl.BlockSpec((C0, 4 * C1), lambda g: (0, 0)),
                pl.BlockSpec((1, 4 * C1), lambda g: (0, 0)),
                pl.BlockSpec((4 * C1, 16 * C2), lambda g: (0, 0)),
                pl.BlockSpec((1, 16 * C2), lambda g: (0, 0)),
                pl.BlockSpec((16 * C2, 16), lambda g: (0, 0)),
                pl.BlockSpec((1, 16), lambda g: (0, 0)),
                pl.BlockSpec((P1 * 16, Hout * Wout), lambda g: (0, 0)),
            ],
            out_specs=pl.BlockSpec((1, G, Hout * Wout), lambda g: (g, 0, 0)),
            scratch_shapes=[pltpu.VMEM((G, P1 * 16), jnp.float32)],
        ),
        compiler_params=pltpu.CompilerParams(
            dimension_semantics=("parallel",),
        ),
    )(xr, W1f, b1f, W2big, b2f, Wcbig, bcf, Bmat)

    # (ngroups, G, Hout*Wout) -> (B, L, 1, Hout, Wout): free row-major reshape.
    return out.reshape(B, L, 1, Hout, Wout)


# ----------------------------------------------------------------------------
# Pure-JAX reference (same math, no Pallas) for a correctness cross-check
# ----------------------------------------------------------------------------
def reference_forward(x, params):
    B, L, C0, h, w = x.shape
    Nimg = B * L
    xr = x.reshape(Nimg, C0, h, w).transpose(0, 2, 3, 1)

    def deconv_ref(xin, W, b):
        N, H, Wd, _ = xin.shape
        Cout = W.shape[1]
        y = jnp.einsum("nijc,cdpq->nipjqd", xin, W)
        y = y.reshape(N, 2 * H, 2 * Wd, Cout) + b
        return jnp.where(y >= 0.0, y, 0.1 * y)

    y = deconv_ref(xr, params["W1"], params["b1"])
    y = deconv_ref(y, params["W2"], params["b2"])
    N2, H2, W2, C2 = y.shape
    z = jax.nn.sigmoid(jnp.einsum("nijc,c->nij", y, params["Wc"].reshape(C2))
                       + params["bc"][0])
    Ah = jnp.asarray(_bilinear_matrix_np(H2))
    AwT = jnp.asarray(_bilinear_matrix_np(W2)).T
    out = jnp.einsum("ph,nhw,wq->npq", Ah, z, AwT)
    return out.reshape(B, L, 1, 8 * h, 8 * w)


if __name__ == "__main__":
    B, L = 2, 4
    hidden_channels = [32, 16, 8]
    h = w = 4  # H/8 = W/8 = 4  ->  output spatial 32x32

    key = jax.random.PRNGKey(0)
    kx, kp = jax.random.split(key)
    x = jax.random.normal(kx, (B, L, hidden_channels[0], h, w), jnp.float32)
    params = init_params(kp, hidden_channels)

    fwd = jax.jit(feature_decoding_forward)
    out = jax.block_until_ready(fwd(x, params))
    ref = jax.block_until_ready(reference_forward(x, params))

    assert out.shape == (B, L, 1, 8 * h, 8 * w), out.shape
    max_err = float(jnp.max(jnp.abs(out - ref)))
    assert max_err < 5e-3, f"max abs err {max_err}"
    print("KERNEL_OK")
</pallas_src>

<mosaic_0001>
module attributes {stable_mosaic.version = 11 : i64} {
  func.func @_fused_decode_kernel(%arg0: i32, %arg1: memref<1x64x32xf32, #tpu.memory_space<vmem>>, %arg2: memref<32x64xf32, #tpu.memory_space<vmem>>, %arg3: memref<1x64xf32, #tpu.memory_space<vmem>>, %arg4: memref<64x128xf32, #tpu.memory_space<vmem>>, %arg5: memref<1x128xf32, #tpu.memory_space<vmem>>, %arg6: memref<128x16xf32, #tpu.memory_space<vmem>>, %arg7: memref<1x16xf32, #tpu.memory_space<vmem>>, %arg8: memref<256x1024xf32, #tpu.memory_space<vmem>>, %arg9: memref<1x4x1024xf32, #tpu.memory_space<vmem>>, %arg10: memref<4x256xf32, #tpu.memory_space<vmem>>) attributes {dimension_semantics = [#tpu.dimension_semantics<parallel>], iteration_bounds = array<i64: 2>, scalar_prefetch = 0 : i64, scratch_operands = 1 : i64, tpu.core_type = #tpu.core_type<tc>, window_params = [{transform_indices = @transform_0, window_bounds = array<i64: 1, 64, 32>}, {pipeline_mode = #tpu.pipeline_mode<synchronous>, transform_indices = @transform_1, window_bounds = array<i64: 32, 64>}, {pipeline_mode = #tpu.pipeline_mode<synchronous>, transform_indices = @transform_2, window_bounds = array<i64: 1, 64>}, {pipeline_mode = #tpu.pipeline_mode<synchronous>, transform_indices = @transform_3, window_bounds = array<i64: 64, 128>}, {pipeline_mode = #tpu.pipeline_mode<synchronous>, transform_indices = @transform_4, window_bounds = array<i64: 1, 128>}, {pipeline_mode = #tpu.pipeline_mode<synchronous>, transform_indices = @transform_5, window_bounds = array<i64: 128, 16>}, {pipeline_mode = #tpu.pipeline_mode<synchronous>, transform_indices = @transform_6, window_bounds = array<i64: 1, 16>}, {pipeline_mode = #tpu.pipeline_mode<synchronous>, transform_indices = @transform_7, window_bounds = array<i64: 256, 1024>}, {transform_indices = @transform_8, window_bounds = array<i64: 1, 4, 1024>}]} {
    %c0 = arith.constant 0 : index
    %c0_0 = arith.constant 0 : index
    %c0_1 = arith.constant 0 : index
    %0 = vector.load %arg1[%c0, %c0_0, %c0_1] : memref<1x64x32xf32, #tpu.memory_space<vmem>>, vector<1x64x32xf32>
    %1 = vector.shape_cast %0 : vector<1x64x32xf32> to vector<64x32xf32>
    %c0_2 = arith.constant 0 : index
    %c0_3 = arith.constant 0 : index
    %2 = vector.load %arg2[%c0_2, %c0_3] : memref<32x64xf32, #tpu.memory_space<vmem>>, vector<32x64xf32>
    %cst = arith.constant dense<0.000000e+00> : vector<64x64xf32>
    %3 = tpu.matmul %1, %2, %cst {dimension_numbers = #tpu.dot_dimension_numbers<[1], [0], [0], [1], [0, 0, 1, 1], [], []>} : vector<64x32xf32>, vector<32x64xf32>, vector<64x64xf32> -> vector<64x64xf32>
    %c0_4 = arith.constant 0 : index
    %c0_5 = arith.constant 0 : index
    %4 = vector.load %arg3[%c0_4, %c0_5] : memref<1x64xf32, #tpu.memory_space<vmem>>, vector<1x64xf32>
    %5 = vector.broadcast %4 : vector<1x64xf32> to vector<64x64xf32>
    %6 = arith.addf %3, %5 : vector<64x64xf32>
    %cst_6 = arith.constant 0.000000e+00 : f32
    %7 = vector.broadcast %cst_6 : f32 to vector<64x64xf32>
    %8 = arith.cmpf oge, %6, %7 : vector<64x64xf32>
    %cst_7 = arith.constant 1.000000e-01 : f32
    %9 = vector.broadcast %cst_7 : f32 to vector<64x64xf32>
    %10 = arith.mulf %9, %6 : vector<64x64xf32>
    %11 = arith.select %8, %6, %10 : vector<64x64xi1>, vector<64x64xf32>
    %c0_8 = arith.constant 0 : index
    %c0_9 = arith.constant 0 : index
    %12 = vector.load %arg4[%c0_8, %c0_9] : memref<64x128xf32, #tpu.memory_space<vmem>>, vector<64x128xf32>
    %cst_10 = arith.constant dense<0.000000e+00> : vector<64x128xf32>
    %13 = tpu.matmul %11, %12, %cst_10 {dimension_numbers = #tpu.dot_dimension_numbers<[1], [0], [0], [1], [0, 0, 1, 1], [], []>} : vector<64x64xf32>, vector<64x128xf32>, vector<64x128xf32> -> vector<64x128xf32>
    %c0_11 = arith.constant 0 : index
    %c0_12 = arith.constant 0 : index
    %14 = vector.load %arg5[%c0_11, %c0_12] : memref<1x128xf32, #tpu.memory_space<vmem>>, vector<1x128xf32>
    %15 = vector.broadcast %14 : vector<1x128xf32> to vector<64x128xf32>
    %16 = arith.addf %13, %15 : vector<64x128xf32>
    %cst_13 = arith.constant 0.000000e+00 : f32
    %17 = vector.broadcast %cst_13 : f32 to vector<64x128xf32>
    %18 = arith.cmpf oge, %16, %17 : vector<64x128xf32>
    %cst_14 = arith.constant 1.000000e-01 : f32
    %19 = vector.broadcast %cst_14 : f32 to vector<64x128xf32>
    %20 = arith.mulf %19, %16 : vector<64x128xf32>
    %21 = arith.select %18, %16, %20 : vector<64x128xi1>, vector<64x128xf32>
    %c0_15 = arith.constant 0 : index
    %c0_16 = arith.constant 0 : index
    %22 = vector.load %arg6[%c0_15, %c0_16] : memref<128x16xf32, #tpu.memory_space<vmem>>, vector<128x16xf32>
    %cst_17 = arith.constant dense<0.000000e+00> : vector<64x16xf32>
    %23 = tpu.matmul %21, %22, %cst_17 {dimension_numbers = #tpu.dot_dimension_numbers<[1], [0], [0], [1], [0, 0, 1, 1], [], []>} : vector<64x128xf32>, vector<128x16xf32>, vector<64x16xf32> -> vector<64x16xf32>
    %c0_18 = arith.constant 0 : index
    %c0_19 = arith.constant 0 : index
    %24 = vector.load %arg7[%c0_18, %c0_19] : memref<1x16xf32, #tpu.memory_space<vmem>>, vector<1x16xf32>
    %25 = vector.broadcast %24 : vector<1x16xf32> to vector<64x16xf32>
    %26 = arith.addf %23, %25 : vector<64x16xf32>
    %27 = arith.negf %26 : vector<64x16xf32>
    %28 = math.exp %27 : vector<64x16xf32>
    %cst_20 = arith.constant 1.000000e+00 : f32
    %29 = vector.broadcast %cst_20 : f32 to vector<64x16xf32>
    %30 = arith.addf %29, %28 : vector<64x16xf32>
    %31 = arith.divf %29, %30 : vector<64x16xf32>
    %32 = vector.extract_strided_slice %31 {offsets = [0, 0], sizes = [4, 16], strides = [1, 1]} : vector<64x16xf32> to vector<4x16xf32>
    %c0_21 = arith.constant 0 : index
    %c0_22 = arith.constant 0 : index
    %33 = vector.load %arg10[%c0_21, %c0_22] : memref<4x256xf32, #tpu.memory_space<vmem>>, vector<4x16xf32>
    tpu.vector_store %arg10[%c0_21, %c0_22], %32 {strides = array<i32>} : memref<4x256xf32, #tpu.memory_space<vmem>>, vector<4x16xf32>,
    %34 = vector.extract_strided_slice %31 {offsets = [4, 0], sizes = [4, 16], strides = [1, 1]} : vector<64x16xf32> to vector<4x16xf32>
    %c0_23 = arith.constant 0 : index
    %c16 = arith.constant 16 : index
    %35 = vector.load %arg10[%c0_23, %c16] : memref<4x256xf32, #tpu.memory_space<vmem>>, vector<4x16xf32>
    tpu.vector_store %arg10[%c0_23, %c16], %34 {strides = array<i32>} : memref<4x256xf32, #tpu.memory_space<vmem>>, vector<4x16xf32>,
    %36 = vector.extract_strided_slice %31 {offsets = [8, 0], sizes = [4, 16], strides = [1, 1]} : vector<64x16xf32> to vector<4x16xf32>
    %c0_24 = arith.constant 0 : index
    %c32 = arith.constant 32 : index
    %37 = vector.load %arg10[%c0_24, %c32] : memref<4x256xf32, #tpu.memory_space<vmem>>, vector<4x16xf32>
    tpu.vector_store %arg10[%c0_24, %c32], %36 {strides = array<i32>} : memref<4x256xf32, #tpu.memory_space<vmem>>, vector<4x16xf32>,
    %38 = vector.extract_strided_slice %31 {offsets = [12, 0], sizes = [4, 16], strides = [1, 1]} : vector<64x16xf32> to vector<4x16xf32>
    %c0_25 = arith.constant 0 : index
    %c48 = arith.constant 48 : index
    %39 = vector.load %arg10[%c0_25, %c48] : memref<4x256xf32, #tpu.memory_space<vmem>>, vector<4x16xf32>
    tpu.vector_store %arg10[%c0_25, %c48], %38 {strides = array<i32>} : memref<4x256xf32, #tpu.memory_space<vmem>>, vector<4x16xf32>,
    %40 = vector.extract_strided_slice %31 {offsets = [16, 0], sizes = [4, 16], strides = [1, 1]} : vector<64x16xf32> to vector<4x16xf32>
    %c0_26 = arith.constant 0 : index
    %c64 = arith.constant 64 : index
    %41 = vector.load %arg10[%c0_26, %c64] : memref<4x256xf32, #tpu.memory_space<vmem>>, vector<4x16xf32>
    tpu.vector_store %arg10[%c0_26, %c64], %40 {strides = array<i32>} : memref<4x256xf32, #tpu.memory_space<vmem>>, vector<4x16xf32>,
    %42 = vector.extract_strided_slice %31 {offsets = [20, 0], sizes = [4, 16], strides = [1, 1]} : vector<64x16xf32> to vector<4x16xf32>
    %c0_27 = arith.constant 0 : index
    %c80 = arith.constant 80 : index
    %43 = vector.load %arg10[%c0_27, %c80] : memref<4x256xf32, #tpu.memory_space<vmem>>, vector<4x16xf32>
    tpu.vector_store %arg10[%c0_27, %c80], %42 {strides = array<i32>} : memref<4x256xf32, #tpu.memory_space<vmem>>, vector<4x16xf32>,
    %44 = vector.extract_strided_slice %31 {offsets = [24, 0], sizes = [4, 16], strides = [1, 1]} : vector<64x16xf32> to vector<4x16xf32>
    %c0_28 = arith.constant 0 : index
    %c96 = arith.constant 96 : index
    %45 = vector.load %arg10[%c0_28, %c96] : memref<4x256xf32, #tpu.memory_space<vmem>>, vector<4x16xf32>
    tpu.vector_store %arg10[%c0_28, %c96], %44 {strides = array<i32>} : memref<4x256xf32, #tpu.memory_space<vmem>>, vector<4x16xf32>,
    %46 = vector.extract_strided_slice %31 {offsets = [28, 0], sizes = [4, 16], strides = [1, 1]} : vector<64x16xf32> to vector<4x16xf32>
    %c0_29 = arith.constant 0 : index
    %c112 = arith.constant 112 : index
    %47 = vector.load %arg10[%c0_29, %c112] : memref<4x256xf32, #tpu.memory_space<vmem>>, vector<4x16xf32>
    tpu.vector_store %arg10[%c0_29, %c112], %46 {strides = array<i32>} : memref<4x256xf32, #tpu.memory_space<vmem>>, vector<4x16xf32>,
    %48 = vector.extract_strided_slice %31 {offsets = [32, 0], sizes = [4, 16], strides = [1, 1]} : vector<64x16xf32> to vector<4x16xf32>
    %c0_30 = arith.constant 0 : index
    %c128 = arith.constant 128 : index
    %49 = vector.load %arg10[%c0_30, %c128] : memref<4x256xf32, #tpu.memory_space<vmem>>, vector<4x16xf32>
    tpu.vector_store %arg10[%c0_30, %c128], %48 {strides = array<i32>} : memref<4x256xf32, #tpu.memory_space<vmem>>, vector<4x16xf32>,
    %50 = vector.extract_strided_slice %31 {offsets = [36, 0], sizes = [4, 16], strides = [1, 1]} : vector<64x16xf32> to vector<4x16xf32>
    %c0_31 = arith.constant 0 : index
    %c144 = arith.constant 144 : index
    %51 = vector.load %arg10[%c0_31, %c144] : memref<4x256xf32, #tpu.memory_space<vmem>>, vector<4x16xf32>
    tpu.vector_store %arg10[%c0_31, %c144], %50 {strides = array<i32>} : memref<4x256xf32, #tpu.memory_space<vmem>>, vector<4x16xf32>,
    %52 = vector.extract_strided_slice %31 {offsets = [40, 0], sizes = [4, 16], strides = [1, 1]} : vector<64x16xf32> to vector<4x16xf32>
    %c0_32 = arith.constant 0 : index
    %c160 = arith.constant 160 : index
    %53 = vector.load %arg10[%c0_32, %c160] : memref<4x256xf32, #tpu.memory_space<vmem>>, vector<4x16xf32>
    tpu.vector_store %arg10[%c0_32, %c160], %52 {strides = array<i32>} : memref<4x256xf32, #tpu.memory_space<vmem>>, vector<4x16xf32>,
    %54 = vector.extract_strided_slice %31 {offsets = [44, 0], sizes = [4, 16], strides = [1, 1]} : vector<64x16xf32> to vector<4x16xf32>
    %c0_33 = arith.constant 0 : index
    %c176 = arith.constant 176 : index
    %55 = vector.load %arg10[%c0_33, %c176] : memref<4x256xf32, #tpu.memory_space<vmem>>, vector<4x16xf32>
    tpu.vector_store %arg10[%c0_33, %c176], %54 {strides = array<i32>} : memref<4x256xf32, #tpu.memory_space<vmem>>, vector<4x16xf32>,
    %56 = vector.extract_strided_slice %31 {offsets = [48, 0], sizes = [4, 16], strides = [1, 1]} : vector<64x16xf32> to vector<4x16xf32>
    %c0_34 = arith.constant 0 : index
    %c192 = arith.constant 192 : index
    %57 = vector.load %arg10[%c0_34, %c192] : memref<4x256xf32, #tpu.memory_space<vmem>>, vector<4x16xf32>
    tpu.vector_store %arg10[%c0_34, %c192], %56 {strides = array<i32>} : memref<4x256xf32, #tpu.memory_space<vmem>>, vector<4x16xf32>,
    %58 = vector.extract_strided_slice %31 {offsets = [52, 0], sizes = [4, 16], strides = [1, 1]} : vector<64x16xf32> to vector<4x16xf32>
    %c0_35 = arith.constant 0 : index
    %c208 = arith.constant 208 : index
    %59 = vector.load %arg10[%c0_35, %c208] : memref<4x256xf32, #tpu.memory_space<vmem>>, vector<4x16xf32>
    tpu.vector_store %arg10[%c0_35, %c208], %58 {strides = array<i32>} : memref<4x256xf32, #tpu.memory_space<vmem>>, vector<4x16xf32>,
    %60 = vector.extract_strided_slice %31 {offsets = [56, 0], sizes = [4, 16], strides = [1, 1]} : vector<64x16xf32> to vector<4x16xf32>
    %c0_36 = arith.constant 0 : index
    %c224 = arith.constant 224 : index
    %61 = vector.load %arg10[%c0_36, %c224] : memref<4x256xf32, #tpu.memory_space<vmem>>, vector<4x16xf32>
    tpu.vector_store %arg10[%c0_36, %c224], %60 {strides = array<i32>} : memref<4x256xf32, #tpu.memory_space<vmem>>, vector<4x16xf32>,
    %62 = vector.extract_strided_slice %31 {offsets = [60, 0], sizes = [4, 16], strides = [1, 1]} : vector<64x16xf32> to vector<4x16xf32>
    %c0_37 = arith.constant 0 : index
    %c240 = arith.constant 240 : index
    %63 = vector.load %arg10[%c0_37, %c240] : memref<4x256xf32, #tpu.memory_space<vmem>>, vector<4x16xf32>
    tpu.vector_store %arg10[%c0_37, %c240], %62 {strides = array<i32>} : memref<4x256xf32, #tpu.memory_space<vmem>>, vector<4x16xf32>,
    %c0_38 = arith.constant 0 : index
    %c0_39 = arith.constant 0 : index
    %64 = vector.load %arg10[%c0_38, %c0_39] : memref<4x256xf32, #tpu.memory_space<vmem>>, vector<4x256xf32>
    %c0_40 = arith.constant 0 : index
    %c0_41 = arith.constant 0 : index
    %65 = vector.load %arg8[%c0_40, %c0_41] : memref<256x1024xf32, #tpu.memory_space<vmem>>, vector<256x1024xf32>
    %cst_42 = arith.constant dense<0.000000e+00> : vector<4x1024xf32>
    %66 = tpu.matmul %64, %65, %cst_42 {dimension_numbers = #tpu.dot_dimension_numbers<[1], [0], [0], [1], [0, 0, 1, 1], [], []>} : vector<4x256xf32>, vector<256x1024xf32>, vector<4x1024xf32> -> vector<4x1024xf32>
    %c0_43 = arith.constant 0 : index
    %c0_44 = arith.constant 0 : index
    %c0_45 = arith.constant 0 : index
    %67 = vector.load %arg9[%c0_43, %c0_44, %c0_45] : memref<1x4x1024xf32, #tpu.memory_space<vmem>>, vector<1x4x1024xf32>
    %68 = vector.shape_cast %67 : vector<1x4x1024xf32> to vector<4x1024xf32>
    %69 = vector.shape_cast %66 : vector<4x1024xf32> to vector<1x4x1024xf32>
    tpu.vector_store %arg9[%c0_43, %c0_44, %c0_45], %69 {strides = array<i32>} : memref<1x4x1024xf32, #tpu.memory_space<vmem>>, vector<1x4x1024xf32>,
    return
  }
  func.func @transform_0(%arg0: i32) -> (i32, i32, i32) {
    %c0_i32 = arith.constant 0 : i32
    %c0_i32_0 = arith.constant 0 : i32
    %c0_i32_1 = arith.constant 0 : i32
    return %arg0, %c0_i32, %c0_i32_0 : i32, i32, i32
  }
  func.func @transform_1(%arg0: i32) -> (i32, i32) {
    %c0_i32 = arith.constant 0 : i32
    %c0_i32_0 = arith.constant 0 : i32
    %c0_i32_1 = arith.constant 0 : i32
    return %c0_i32, %c0_i32_0 : i32, i32
  }
  func.func @transform_2(%arg0: i32) -> (i32, i32) {
    %c0_i32 = arith.constant 0 : i32
    %c0_i32_0 = arith.constant 0 : i32
    %c0_i32_1 = arith.constant 0 : i32
    return %c0_i32, %c0_i32_0 : i32, i32
  }
  func.func @transform_3(%arg0: i32) -> (i32, i32) {
    %c0_i32 = arith.constant 0 : i32
    %c0_i32_0 = arith.constant 0 : i32
    %c0_i32_1 = arith.constant 0 : i32
    return %c0_i32, %c0_i32_0 : i32, i32
  }
  func.func @transform_4(%arg0: i32) -> (i32, i32) {
    %c0_i32 = arith.constant 0 : i32
    %c0_i32_0 = arith.constant 0 : i32
    %c0_i32_1 = arith.constant 0 : i32
    return %c0_i32, %c0_i32_0 : i32, i32
  }
  func.func @transform_5(%arg0: i32) -> (i32, i32) {
    %c0_i32 = arith.constant 0 : i32
    %c0_i32_0 = arith.constant 0 : i32
    %c0_i32_1 = arith.constant 0 : i32
    return %c0_i32, %c0_i32_0 : i32, i32
  }
  func.func @transform_6(%arg0: i32) -> (i32, i32) {
    %c0_i32 = arith.constant 0 : i32
    %c0_i32_0 = arith.constant 0 : i32
    %c0_i32_1 = arith.constant 0 : i32
    return %c0_i32, %c0_i32_0 : i32, i32
  }
  func.func @transform_7(%arg0: i32) -> (i32, i32) {
    %c0_i32 = arith.constant 0 : i32
    %c0_i32_0 = arith.constant 0 : i32
    %c0_i32_1 = arith.constant 0 : i32
    return %c0_i32, %c0_i32_0 : i32, i32
  }
  func.func @transform_8(%arg0: i32) -> (i32, i32, i32) {
    %c0_i32 = arith.constant 0 : i32
    %c0_i32_0 = arith.constant 0 : i32
    %c0_i32_1 = arith.constant 0 : i32
    return %arg0, %c0_i32, %c0_i32_0 : i32, i32, i32
  }
}

</mosaic_0001>

<llo_original>
// kernel: tile.19
$region0: #{tile.19}
  %s0 = inlined_call_operand.vmem [shape: f32[16,8], index: 0, kind: input, shape index: {}]
  %s1 = inlined_call_operand.vmem [shape: f32[1,128], index: 1, kind: output, shape index: {}]
  $region1: #{tile.19} parent=0
    #allocation0 [shape = 'u8[4096]{0}', space=vmem, size = 0x1000, scoped, tag = 'scoped mem for output reshape']
    %v2 = vld [vmem:[%s0] sm:$0x1]
    %vm3 = vcmask 64512
    %4 = vst.msk [vmem:[#allocation0] sm:$0x1] %vm3, %v2
    %s5 = scalar_lea.vmem %s0, 15
    %v6 = vld [vmem:[%s5] sm:$0x1]
    %7 = vrot.lane.b32.xlu0 %v6, 120
    %v8 = vpop.permute.xlu0 %7
    %vm9 = vcmask 1048512
    %10 = vst.msk [vmem:[#allocation0] sm:$0x1] %vm9, %v8
    %s11 = scalar_lea.vmem %s0, 14
    %v12 = vld [vmem:[%s11] sm:$0x1]
    %13 = vrot.lane.b32.xlu0 %v12, 112
    %v14 = vpop.permute.xlu0 %13
    %vm15 = vcmask 982912
    %16 = vst.msk [vmem:[#allocation0] sm:$0x1] %vm15, %v14
    %s17 = scalar_lea.vmem %s0, 13
    %v18 = vld [vmem:[%s17] sm:$0x1]
    %19 = vrot.lane.b32.xlu0 %v18, 104
    %v20 = vpop.permute.xlu0 %19
    %vm21 = vcmask 917312
    %22 = vst.msk [vmem:[#allocation0] sm:$0x1] %vm21, %v20
    %s23 = scalar_lea.vmem %s0, 12
    %v24 = vld [vmem:[%s23] sm:$0x1]
    %25 = vrot.lane.b32.xlu0 %v24, 96
    %v26 = vpop.permute.xlu0 %25
    %vm27 = vcmask 851712
    %28 = vst.msk [vmem:[#allocation0] sm:$0x1] %vm27, %v26
    %s29 = scalar_lea.vmem %s0, 11
    %v30 = vld [vmem:[%s29] sm:$0x1]
    %31 = vrot.lane.b32.xlu0 %v30, 88
    %v32 = vpop.permute.xlu0 %31
    %vm33 = vcmask 786112
    %34 = vst.msk [vmem:[#allocation0] sm:$0x1] %vm33, %v32
    %s35 = scalar_lea.vmem %s0, 10
    %v36 = vld [vmem:[%s35] sm:$0x1]
    %37 = vrot.lane.b32.xlu0 %v36, 80
    %v38 = vpop.permute.xlu0 %37
    %vm39 = vcmask 720512
    %40 = vst.msk [vmem:[#allocation0] sm:$0x1] %vm39, %v38
    %s41 = scalar_lea.vmem %s0, 9
    %v42 = vld [vmem:[%s41] sm:$0x1]
    %43 = vrot.lane.b32.xlu0 %v42, 72
    %v44 = vpop.permute.xlu0 %43
    %vm45 = vcmask 654912
    %46 = vst.msk [vmem:[#allocation0] sm:$0x1] %vm45, %v44
    %s47 = scalar_lea.vmem %s0, 8
    %v48 = vld [vmem:[%s47] sm:$0x1]
    %49 = vrot.lane.b32.xlu0 %v48, 64
    %v50 = vpop.permute.xlu0 %49
    %vm51 = vcmask 589312
    %52 = vst.msk [vmem:[#allocation0] sm:$0x1] %vm51, %v50
    %s53 = scalar_lea.vmem %s0, 7
    %v54 = vld [vmem:[%s53] sm:$0x1]
    %55 = vrot.lane.b32.xlu0 %v54, 56
    %v56 = vpop.permute.xlu0 %55
    %vm57 = vcmask 523712
    %58 = vst.msk [vmem:[#allocation0] sm:$0x1] %vm57, %v56
    %s59 = scalar_lea.vmem %s0, 6
    %v60 = vld [vmem:[%s59] sm:$0x1]
    %61 = vrot.lane.b32.xlu0 %v60, 48
    %v62 = vpop.permute.xlu0 %61
    %vm63 = vcmask 458112
    %64 = vst.msk [vmem:[#allocation0] sm:$0x1] %vm63, %v62
    %s65 = scalar_lea.vmem %s0, 5
    %v66 = vld [vmem:[%s65] sm:$0x1]
    %67 = vrot.lane.b32.xlu0 %v66, 40
    %v68 = vpop.permute.xlu0 %67
    %vm69 = vcmask 392512
    %70 = vst.msk [vmem:[#allocation0] sm:$0x1] %vm69, %v68
    %s71 = scalar_lea.vmem %s0, 4
    %v72 = vld [vmem:[%s71] sm:$0x1]
    %73 = vrot.lane.b32.xlu0 %v72, 32
    %v74 = vpop.permute.xlu0 %73
    %vm75 = vcmask 326912
    %76 = vst.msk [vmem:[#allocation0] sm:$0x1] %vm75, %v74
    %s77 = scalar_lea.vmem %s0, 3
    %v78 = vld [vmem:[%s77] sm:$0x1]
    %79 = vrot.lane.b32.xlu0 %v78, 24
    %v80 = vpop.permute.xlu0 %79
    %vm81 = vcmask 261312
    %82 = vst.msk [vmem:[#allocation0] sm:$0x1] %vm81, %v80
    %s83 = scalar_lea.vmem %s0, 2
    %v84 = vld [vmem:[%s83] sm:$0x1]
    %85 = vrot.lane.b32.xlu0 %v84, 16
    %v86 = vpop.permute.xlu0 %85
    %vm87 = vcmask 195712
    %88 = vst.msk [vmem:[#allocation0] sm:$0x1] %vm87, %v86
    %s89 = scalar_lea.vmem %s0, 1
    %v90 = vld [vmem:[%s89] sm:$0x1]
    %91 = vrot.lane.b32.xlu0 %v90, 8
    %v92 = vpop.permute.xlu0 %91
    %vm93 = vcmask 130112
    %94 = vst.msk [vmem:[#allocation0] sm:$0x1] %vm93, %v92
    %s96 = sshllo.u32 0, 1
    %v98 = vld [vmem:[#allocation0] sm:%s96]
    %s99 = sshllo.u32 0, 1
    %100 = vst [vmem:[%s1] sm:%s99] %v98

// kernel: tile.13
$region0: #{tile.13}
  #allocation0 [shape = 's32[1]{0}', space=sflag, size = 0x4, scoped, tag = 'scoped memory for tile.13']
  %s0 = inlined_call_operand.vmem [shape: f32[16], index: 0, kind: input, shape index: {}]
  %s1 = inlined_call_operand.vmem [shape: f32[4,16], index: 1, kind: output, shape index: {}]
  // Predicated region
  $region2: #{tile.13} parent=0 // pred_check
    _
  $region3: #{tile.13} parent=0 // pred_check_branch
    %3 = sbr.rel (0) target = $region5
  $region4: #{tile.13} parent=0 // pred_region
    _
  $region5: #{tile.13} parent=0 // pred_fallthru
    _
  %v4 = vld [vmem:[%s0] ss:$0 sm:$0xff]
  %5 = vst [vmem:[%s1] sm:$0xf] %v4

// kernel: tile.14
$region0: #{tile.14}
  %s0 = inlined_call_operand.vmem [shape: f32[4,16], index: 0, kind: input, shape index: {}]
  %s1 = inlined_call_operand.vmem [shape: f32[1,64], index: 1, kind: output, shape index: {}]
  $region1: #{tile.14} parent=0
    #allocation0 [shape = 'u8[4096]{0}', space=vmem, size = 0x1000, scoped, tag = 'scoped mem for output reshape']
    #allocation1 [shape = 'u8[4096]{0}', space=vmem, size = 0x1000, scoped, tag = 'scoped mem for input reshape']
    %s3 = sshllo.u32 0, 4
    %v4 = vld [vmem:[%s0] sm:%s3]
    %5 = vst [vmem:[#allocation1] sm:%s3] %v4
    %v6 = vld [vmem:[#allocation1] sm:$0x1]
    %vm7 = vcmask 130048
    %8 = vst.msk [vmem:[#allocation0] sm:$0x1] %vm7, %v6
    %s9 = scalar_lea.vmem [#allocation1], 3
    %v10 = vld [vmem:[%s9] sm:$0x1]
    %11 = vrot.lane.b32.xlu0 %v10, 48
    %v12 = vpop.permute.xlu0 %11
    %vm13 = vcmask 523648
    %14 = vst.msk [vmem:[#allocation0] sm:$0x1] %vm13, %v12
    %s15 = scalar_lea.vmem [#allocation1], 2
    %v16 = vld [vmem:[%s15] sm:$0x1]
    %17 = vrot.lane.b32.xlu0 %v16, 32
    %v18 = vpop.permute.xlu0 %17
    %vm19 = vcmask 392448
    %20 = vst.msk [vmem:[#allocation0] sm:$0x1] %vm19, %v18
    %s21 = scalar_lea.vmem [#allocation1], 1
    %v22 = vld [vmem:[%s21] sm:$0x1]
    %23 = vrot.lane.b32.xlu0 %v22, 16
    %v24 = vpop.permute.xlu0 %23
    %vm25 = vcmask 261248
    %26 = vst.msk [vmem:[#allocation0] sm:$0x1] %vm25, %v24
    %s28 = sshllo.u32 0, 1
    %v30 = vld [vmem:[#allocation0] sm:%s28]
    %s31 = sshllo.u32 0, 1
    %32 = vst [vmem:[%s1] sm:%s31] %v30

// kernel: feature_decoding_forward.1
$region0: #{feature_decoding_forward.1}
  #allocation0 [shape = 'u32[]', space=smem, size = 0x4, offset = 0x4, fixed_abs, tag = 'smem constant byte address 0x4 - core index']
  #allocation1 [shape = 'u32[144,128]{1,0:T(1,128)}', space=vmem, size = 0x12000, scoped, tag = 'internal scratch']
  #allocation2 [shape = 'f32[4,256]{1,0:T(4,128)}', space=vmem, size = 0x1000, scoped, tag = 'scratch operand']
  %s0 = inlined_call_operand.vmem [shape: f32[2,64,32], index: 0, kind: input, shape index: {}]
  %s1 = inlined_call_operand.vmem [shape: f32[32,64], index: 1, kind: input, shape index: {}]
  %s2 = inlined_call_operand.vmem [shape: f32[1,64], index: 2, kind: input, shape index: {}]
  %s3 = inlined_call_operand.vmem [shape: f32[64,128], index: 3, kind: input, shape index: {}]
  %s4 = inlined_call_operand.vmem [shape: f32[1,128], index: 4, kind: input, shape index: {}]
  %s5 = inlined_call_operand.vmem [shape: f32[128,16], index: 5, kind: input, shape index: {}]
  %s6 = inlined_call_operand.vmem [shape: f32[1,16], index: 6, kind: input, shape index: {}]
  %s7 = inlined_call_operand.hbm [shape: f32[256,1024], index: 7, kind: input, shape index: {}]
  %s8 = inlined_call_operand.vmem [shape: f32[2,4,1024], index: 8, kind: output, shape index: {}]
  %s9 = sld [smem:[#allocation0]]
  $region69: #{feature_decoding_forward.1} parent=0
    _
  %s11 = ssub.s32 1, %s9
  %s12 = scalar_select 0, %s11, %s9
  $region1: #{feature_decoding_forward.1} parent=0
    #allocation3 [shape = 'u8[1048576]{0}', space=vmem, size = 0x100000, scoped, tag = 'input window, operand 7, single buffered']
    #allocation4 [shape = 's32[2]{0}', space=sflag, size = 0x8, scoped, tag = 'scoped memory for feature_decoding_forward.1']
    %13 = vsyncpa [#allocation4], 0
    loop: start=0, step=1, limit=4
    $region2: #{feature_decoding_forward.1} parent=1 // loop_pre_header
      _
    $region3: #{feature_decoding_forward.1} parent=1 // loop_header
      %s15 = sphi 0, %s19
      %p16 = scmp.ge.s32.totalorder %s15, 4
      %s25 = sphi 0, %s27
      %s28 = sphi 0, %s25
      %s29 = sphi 0, %s28
      %s45 = sphi 0, %s29
      %s49 = sphi 0, %s49
      %s51 = sphi 0, %s49
      %s52 = sphi 0, %s51
      %s66 = sphi 0, %s52
      %s70 = sphi 0, %s70
      %s72 = sphi 0, %s70
      %s73 = sphi 0, %s72
      %s87 = sphi 0, %s73
      %s91 = sphi 0, %s91
      %s93 = sphi 0, %s91
      %s94 = sphi 0, %s93
      %s108 = sphi 0, %s94
      %s112 = sphi 0, %s112
      %s114 = sphi 0, %s112
      %s115 = sphi 0, %s114
      %s129 = sphi 0, %s115
      %s133 = sphi 0, %s133
      %s135 = sphi 0, %s133
      %s136 = sphi 0, %s135
      %s150 = sphi 0, %s136
      %s154 = sphi 0, %s154
      %s156 = sphi 0, %s154
      %s157 = sphi 0, %s156
      %s171 = sphi 0, %s157
      %s175 = sphi 0, %s175
      %s177 = sphi 0, %s175
      %s178 = sphi 0, %s177
      %s192 = sphi 0, %s178
      %s198 = sphi 0, %s200
      %s201 = sphi 0, %s198
      %s202 = sphi 0, %s201
      %s218 = sphi 0, %s202
    $region4: #{feature_decoding_forward.1} parent=1 // loop_header_branch
      %18 = sbr.rel (%p16) target = $region8
    $region5: #{feature_decoding_forward.1} parent=1 // loop_body
      %s20 = ssub.s32 %s15, 1
      %s21 = ssub.s32 %s15, 2
      %s22 = sadd.s32 %s15, 1
      %s23 = ssub.s32 %s15, %s22
      %p24 = scmp.eq.s32.totalorder %s23, 0
      %s26 = sadd.s32 %s25, 1
      %s27 = scalar_select %p24, %s25, %s26
      %p30 = pneg %p24
      %p31 = scmp.eq.s32.totalorder %s15, 1
      %p32 = por %p30, %p31
      %p33 = scmp.ne.s32.totalorder %s25, %s28
      %p34 = scmp.eq.s32.totalorder %s15, 0
      %p35 = por %p33, %p34
      %p36 = scmp.ne.s32.totalorder %s25, %s28
      %p37 = scmp.eq.s32.totalorder %s20, 1
      %p38 = por %p36, %p37
      %p39 = scmp.ne.s32.totalorder %s28, %s29
      %p40 = scmp.eq.s32.totalorder %s20, 0
      %p41 = por %p39, %p40
      %p42 = scmp.ne.s32.totalorder %s28, %s29
      %p43 = scmp.eq.s32.totalorder %s21, 1
      %p44 = por %p42, %p43
      %p46 = scmp.ne.s32.totalorder %s29, %s45
      %p47 = scmp.eq.s32.totalorder %s21, 0
      %p48 = por %p46, %p47
      %s50 = sadd.s32 %s49, 1
      %p53 = scmp.eq.s32.totalorder %s15, 1
      %p54 = scmp.ne.s32.totalorder %s49, %s51
      %p55 = scmp.eq.s32.totalorder %s15, 0
      %p56 = por %p54, %p55
      %p57 = scmp.ne.s32.totalorder %s49, %s51
      %p58 = scmp.eq.s32.totalorder %s20, 1
      %p59 = por %p57, %p58
      %p60 = scmp.ne.s32.totalorder %s51, %s52
      %p61 = scmp.eq.s32.totalorder %s20, 0
      %p62 = por %p60, %p61
      %p63 = scmp.ne.s32.totalorder %s51, %s52
      %p64 = scmp.eq.s32.totalorder %s21, 1
      %p65 = por %p63, %p64
      %p67 = scmp.ne.s32.totalorder %s52, %s66
      %p68 = scmp.eq.s32.totalorder %s21, 0
      %p69 = por %p67, %p68
      %s71 = sadd.s32 %s70, 1
      %p74 = scmp.eq.s32.totalorder %s15, 1
      %p75 = scmp.ne.s32.totalorder %s70, %s72
      %p76 = scmp.eq.s32.totalorder %s15, 0
      %p77 = por %p75, %p76
      %p78 = scmp.ne.s32.totalorder %s70, %s72
      %p79 = scmp.eq.s32.totalorder %s20, 1
      %p80 = por %p78, %p79
      %p81 = scmp.ne.s32.totalorder %s72, %s73
      %p82 = scmp.eq.s32.totalorder %s20, 0
      %p83 = por %p81, %p82
      %p84 = scmp.ne.s32.totalorder %s72, %s73
      %p85 = scmp.eq.s32.totalorder %s21, 1
      %p86 = por %p84, %p85
      %p88 = scmp.ne.s32.totalorder %s73, %s87
      %p89 = scmp.eq.s32.totalorder %s21, 0
      %p90 = por %p88, %p89
      %s92 = sadd.s32 %s91, 1
      %p95 = scmp.eq.s32.totalorder %s15, 1
      %p96 = scmp.ne.s32.totalorder %s91, %s93
      %p97 = scmp.eq.s32.totalorder %s15, 0
      %p98 = por %p96, %p97
      %p99 = scmp.ne.s32.totalorder %s91, %s93
      %p100 = scmp.eq.s32.totalorder %s20, 1
      %p101 = por %p99, %p100
      %p102 = scmp.ne.s32.totalorder %s93, %s94
      %p103 = scmp.eq.s32.totalorder %s20, 0
      %p104 = por %p102, %p103
      %p105 = scmp.ne.s32.totalorder %s93, %s94
      %p106 = scmp.eq.s32.totalorder %s21, 1
      %p107 = por %p105, %p106
      %p109 = scmp.ne.s32.totalorder %s94, %s108
      %p110 = scmp.eq.s32.totalorder %s21, 0
      %p111 = por %p109, %p110
      %s113 = sadd.s32 %s112, 1
      %p116 = scmp.eq.s32.totalorder %s15, 1
      %p117 = scmp.ne.s32.totalorder %s112, %s114
      %p118 = scmp.eq.s32.totalorder %s15, 0
      %p119 = por %p117, %p118
      %p120 = scmp.ne.s32.totalorder %s112, %s114
      %p121 = scmp.eq.s32.totalorder %s20, 1
      %p122 = por %p120, %p121
      %p123 = scmp.ne.s32.totalorder %s114, %s115
      %p124 = scmp.eq.s32.totalorder %s20, 0
      %p125 = por %p123, %p124
      %p126 = scmp.ne.s32.totalorder %s114, %s115
      %p127 = scmp.eq.s32.totalorder %s21, 1
      %p128 = por %p126, %p127
      %p130 = scmp.ne.s32.totalorder %s115, %s129
      %p131 = scmp.eq.s32.totalorder %s21, 0
      %p132 = por %p130, %p131
      %s134 = sadd.s32 %s133, 1
      %p137 = scmp.eq.s32.totalorder %s15, 1
      %p138 = scmp.ne.s32.totalorder %s133, %s135
      %p139 = scmp.eq.s32.totalorder %s15, 0
      %p140 = por %p138, %p139
      %p141 = scmp.ne.s32.totalorder %s133, %s135
      %p142 = scmp.eq.s32.totalorder %s20, 1
      %p143 = por %p141, %p142
      %p144 = scmp.ne.s32.totalorder %s135, %s136
      %p145 = scmp.eq.s32.totalorder %s20, 0
      %p146 = por %p144, %p145
      %p147 = scmp.ne.s32.totalorder %s135, %s136
      %p148 = scmp.eq.s32.totalorder %s21, 1
      %p149 = por %p147, %p148
      %p151 = scmp.ne.s32.totalorder %s136, %s150
      %p152 = scmp.eq.s32.totalorder %s21, 0
      %p153 = por %p151, %p152
      %s155 = sadd.s32 %s154, 1
      %p158 = scmp.eq.s32.totalorder %s15, 1
      %p159 = scmp.ne.s32.totalorder %s154, %s156
      %p160 = scmp.eq.s32.totalorder %s15, 0
      %p161 = por %p159, %p160
      %p162 = scmp.ne.s32.totalorder %s154, %s156
      %p163 = scmp.eq.s32.totalorder %s20, 1
      %p164 = por %p162, %p163
      %p165 = scmp.ne.s32.totalorder %s156, %s157
      %p166 = scmp.eq.s32.totalorder %s20, 0
      %p167 = por %p165, %p166
      %p168 = scmp.ne.s32.totalorder %s156, %s157
      %p169 = scmp.eq.s32.totalorder %s21, 1
      %p170 = por %p168, %p169
      %p172 = scmp.ne.s32.totalorder %s157, %s171
      %p173 = scmp.eq.s32.totalorder %s21, 0
      %p174 = por %p172, %p173
      %s176 = sadd.s32 %s175, 1
      %p179 = scmp.eq.s32.totalorder %s15, 1
      %p180 = scmp.ne.s32.totalorder %s175, %s177
      %p181 = scmp.eq.s32.totalorder %s15, 0
      %p182 = por %p180, %p181
      %p183 = scmp.ne.s32.totalorder %s175, %s177
      %p184 = scmp.eq.s32.totalorder %s20, 1
      %p185 = por %p183, %p184
      %p186 = scmp.ne.s32.totalorder %s177, %s178
      %p187 = scmp.eq.s32.totalorder %s20, 0
      %p188 = por %p186, %p187
      %p189 = scmp.ne.s32.totalorder %s177, %s178
      %p190 = scmp.eq.s32.totalorder %s21, 1
      %p191 = por %p189, %p190
      %p193 = scmp.ne.s32.totalorder %s178, %s192
      %p194 = scmp.eq.s32.totalorder %s21, 0
      %p195 = por %p193, %p194
      %s196 = ssub.s32 %s15, %s22
      %p197 = scmp.eq.s32.totalorder %s196, 0
      %s199 = sadd.s32 %s198, 1
      %s200 = scalar_select %p197, %s198, %s199
      %p203 = pneg %p197
      %p204 = scmp.eq.s32.totalorder %s15, 1
      %p205 = por %p203, %p204
      %p206 = scmp.ne.s32.totalorder %s198, %s201
      %p207 = scmp.eq.s32.totalorder %s15, 0
      %p208 = por %p206, %p207
      %p209 = scmp.ne.s32.totalorder %s198, %s201
      %p210 = scmp.eq.s32.totalorder %s20, 1
      %p211 = por %p209, %p210
      %p212 = scmp.ne.s32.totalorder %s201, %s202
      %p213 = scmp.eq.s32.totalorder %s20, 0
      %p214 = por %p212, %p213
      %p215 = scmp.ne.s32.totalorder %s201, %s202
      %p216 = scmp.eq.s32.totalorder %s21, 1
      %p217 = por %p215, %p216
      %p219 = scmp.ne.s32.totalorder %s202, %s218
      %p220 = scmp.eq.s32.totalorder %s21, 0
      %p221 = por %p219, %p220
      %p222 = scmp.le.s32.totalorder 1, %s15
      %p223 = scmp.lt.s32.totalorder %s15, 3
      %p224 = pnand %p222, %p223
      %p225 = pneg %p224
      // Predicated region
      $region9: #{feature_decoding_forward.1} parent=5 // pred_check
        _
      $region10: #{feature_decoding_forward.1} parent=5 // pred_check_branch
        %227 = sbr.rel (%p224) target = $region12
      $region11: #{feature_decoding_forward.1} parent=5 // pred_region
        %s228 = ssub.s32 %s15, 1
        // Predicated region
        $region13: #{feature_decoding_forward.1} parent=11 // pred_check
          %p229 = pneg %p62
        $region14: #{feature_decoding_forward.1} parent=11 // pred_check_branch
          %231 = sbr.rel (%p229) target = $region16
        $region15: #{feature_decoding_forward.1} parent=11 // pred_region
          _
        $region16: #{feature_decoding_forward.1} parent=11 // pred_fallthru
          _
        // Predicated region
        $region17: #{feature_decoding_forward.1} parent=11 // pred_check
          %p232 = pneg %p83
        $region18: #{feature_decoding_forward.1} parent=11 // pred_check_branch
          %234 = sbr.rel (%p232) target = $region20
        $region19: #{feature_decoding_forward.1} parent=11 // pred_region
          _
        $region20: #{feature_decoding_forward.1} parent=11 // pred_fallthru
          _
        // Predicated region
        $region21: #{feature_decoding_forward.1} parent=11 // pred_check
          %p235 = pneg %p104
        $region22: #{feature_decoding_forward.1} parent=11 // pred_check_branch
          %237 = sbr.rel (%p235) target = $region24
        $region23: #{feature_decoding_forward.1} parent=11 // pred_region
          _
        $region24: #{feature_decoding_forward.1} parent=11 // pred_fallthru
          _
        // Predicated region
        $region25: #{feature_decoding_forward.1} parent=11 // pred_check
          %p238 = pneg %p125
        $region26: #{feature_decoding_forward.1} parent=11 // pred_check_branch
          %240 = sbr.rel (%p238) target = $region28
        $region27: #{feature_decoding_forward.1} parent=11 // pred_region
          _
        $region28: #{feature_decoding_forward.1} parent=11 // pred_fallthru
          _
        // Predicated region
        $region29: #{feature_decoding_forward.1} parent=11 // pred_check
          %p241 = pneg %p146
        $region30: #{feature_decoding_forward.1} parent=11 // pred_check_branch
          %243 = sbr.rel (%p241) target = $region32
        $region31: #{feature_decoding_forward.1} parent=11 // pred_region
          _
        $region32: #{feature_decoding_forward.1} parent=11 // pred_fallthru
          _
        // Predicated region
        $region33: #{feature_decoding_forward.1} parent=11 // pred_check
          %p244 = pneg %p167
        $region34: #{feature_decoding_forward.1} parent=11 // pred_check_branch
          %246 = sbr.rel (%p244) target = $region36
        $region35: #{feature_decoding_forward.1} parent=11 // pred_region
          _
        $region36: #{feature_decoding_forward.1} parent=11 // pred_fallthru
          _
        // Predicated region
        $region37: #{feature_decoding_forward.1} parent=11 // pred_check
          %p247 = pneg %p188
        $region38: #{feature_decoding_forward.1} parent=11 // pred_check_branch
          %249 = sbr.rel (%p247) target = $region40
        $region39: #{feature_decoding_forward.1} parent=11 // pred_region
          %s251 = ssub.s32 32768, 32768
          %252 = vsyncadd [#allocation4], %s251
          %s253 = sshll.u32 [#allocation3], 4
          %s254 = int_to_ptr.vmem [resolvable:$true] %s253
          %259 = dma.hbm_to_vmem [thread:$0]  %s7, 32768, %s254, [#allocation4], 1024, 1024, 64
        $region40: #{feature_decoding_forward.1} parent=11 // pred_fallthru
          _
      $region12: #{feature_decoding_forward.1} parent=5 // pred_fallthru
        _
      %p260 = scmp.lt.s32.totalorder %s15, 2
      // Predicated region
      $region41: #{feature_decoding_forward.1} parent=5 // pred_check
        %p261 = pneg %p260
      $region42: #{feature_decoding_forward.1} parent=5 // pred_check_branch
        %263 = sbr.rel (%p261) target = $region44
      $region43: #{feature_decoding_forward.1} parent=5 // pred_region
        // Predicated region
        $region45: #{feature_decoding_forward.1} parent=43 // pred_check
          %p264 = pneg %p35
        $region46: #{feature_decoding_forward.1} parent=43 // pred_check_branch
          %266 = sbr.rel (%p264) target = $region48
        $region47: #{feature_decoding_forward.1} parent=43 // pred_region
          %p267 = scmp.lt.s32.totalorder %s15, 1
          %s268 = scalar_select %p267, %s15, 1
          %s269 = smul.addr %s268, 8
          %s270 = smul.addr %s269, 8
          %s271 = scalar_lea.vmem %s0, %s270
        $region48: #{feature_decoding_forward.1} parent=43 // pred_fallthru
          _
      $region44: #{feature_decoding_forward.1} parent=5 // pred_fallthru
        _
      %p272 = scmp.le.s32.totalorder 1, %s15
      %p273 = scmp.lt.s32.totalorder %s15, 3
      %p274 = pnand %p272, %p273
      %p275 = pneg %p274
      // Predicated region
      $region49: #{feature_decoding_forward.1} parent=5 // pred_check
        _
      $region50: #{feature_decoding_forward.1} parent=5 // pred_check_branch
        %277 = sbr.rel (%p274) target = $region52
      $region51: #{feature_decoding_forward.1} parent=5 // pred_region
        %s278 = ssub.s32 %s15, 1
        // Predicated region
        $region53: #{feature_decoding_forward.1} parent=51 // pred_check
          %p279 = pneg %p188
        $region54: #{feature_decoding_forward.1} parent=51 // pred_check_branch
          %281 = sbr.rel (%p279) target = $region56
        $region55: #{feature_decoding_forward.1} parent=51 // pred_region
          %282 = dma.done [#allocation4], 32768
        $region56: #{feature_decoding_forward.1} parent=51 // pred_fallthru
          _
        %p283 = scmp.lt.s32.totalorder %s20, 1
        %s284 = scalar_select %p283, %s20, 1
        %s285 = smul.addr %s284, 8
        %s286 = smul.addr %s285, 8
        %s287 = scalar_lea.vmem %s0, %s286
        %p288 = pneg %p41
        %p289 = pneg %p38
        %p290 = pneg %p62
        %p291 = pneg %p59
        %p292 = pneg %p83
        %p293 = pneg %p80
        %p294 = pneg %p104
        %p295 = pneg %p101
        %p296 = pneg %p125
        %p297 = pneg %p122
        %p298 = pneg %p146
        %p299 = pneg %p143
        %p300 = pneg %p167
        %p301 = pneg %p164
        %p302 = pneg %p188
        %p303 = pneg %p185
        %p304 = pneg %p214
        %p305 = pneg %p211
        %p306 = scmp.lt.s32.totalorder %s20, 1
        %s307 = scalar_select %p306, %s20, 1
        %s308 = smul.addr %s307, 8
        %s309 = smul.addr %s308, 4
        %s310 = scalar_lea.vmem %s8, %s309
        %p311 = scmp.lt.s32.totalorder %s20, 1
        %s312 = scalar_select %p311, %s20, 1
        %s313 = smul.addr %s312, 8
        %s314 = smul.addr %s313, 8
        %s315 = scalar_lea.vmem %s0, %s314
        %p316 = scmp.lt.s32.totalorder %s20, 1
        %s317 = scalar_select %p316, %s20, 1
        %s318 = smul.addr %s317, 8
        %s319 = smul.addr %s318, 4
        %s320 = scalar_lea.vmem %s8, %s319
        %v321 = vld [vmem:[%s315] sm:$0xff]
        %v322 = vld [vmem:[%s315 + $0x8] sm:$0xff]
        %v323 = vld [vmem:[%s315 + $0x10] sm:$0xff]
        %v324 = vld [vmem:[%s315 + $0x18] sm:$0xff]
        %v325 = vld [vmem:[%s315 + $0x20] sm:$0xff]
        %v326 = vld [vmem:[%s315 + $0x28] sm:$0xff]
        %v327 = vld [vmem:[%s315 + $0x30] sm:$0xff]
        %v328 = vld [vmem:[%s315 + $0x38] sm:$0xff]
        %v329 = vld [vmem:[%s1] sm:$0xff]
        %v330 = vld [vmem:[%s1 + $0x8] sm:$0xff]
        %v331 = vld [vmem:[%s1 + $0x10] sm:$0xff]
        %v332 = vld [vmem:[%s1 + $0x18] sm:$0xff]
        %v333 = vld [vmem:[%s2] sm:$0x1]
        %v335 = vlaneseq
        %v336 = vshrl.u32 %v335, 7
        %v337 = vsub.s32 0, %v336
        %v338 = vrot.slane %v333, %v337
        %vm340 = vcmask 261120
        %v342 = vsel %vm340, %v321, 0
        %v345 = vsel %vm340, %v322, 0
        %v348 = vsel %vm340, %v323, 0
        %v351 = vsel %vm340, %v324, 0
        %v354 = vsel %vm340, %v325, 0
        %v357 = vsel %vm340, %v326, 0
        %v360 = vsel %vm340, %v327, 0
        %v363 = vsel %vm340, %v328, 0
        %365 = vmatprep.subr.mxu0 0.0
        %366 = vmatpush1.msra.mxu0 %v329
        %367 = vmatprep.subr.mxu0 0.0
        %368 = vmatpush1.msra.mxu0 %v330
        %369 = vmatprep.subr.mxu0 0.0
        %370 = vmatpush1.msra.mxu0 %v331
        %371 = vmatprep.subr.mxu0 0.0
        %372 = vmatpush1.msra.mxu0 %v332
        %373 = vmatprep.subr.mxu0 0.0
        %374 = vmatpush1.msra.mxu0 0.0
        %375 = vmatprep.subr.mxu0 0.0
        %376 = vmatpush1.msra.mxu0 0.0
        %377 = vmatprep.subr.mxu0 0.0
        %378 = vmatpush1.msra.mxu0 0.0
        %379 = vmatprep.subr.mxu0 0.0
        %380 = vmatpush1.msra.mxu0 0.0
        %381 = vmatprep.subr.mxu0 0.0
        %382 = vmatpush1.msra.mxu0 0.0
        %383 = vmatprep.subr.mxu0 0.0
        %384 = vmatpush1.msra.mxu0 0.0
        %385 = vmatprep.subr.mxu0 0.0
        %386 = vmatpush1.msra.mxu0 0.0
        %387 = vmatprep.subr.mxu0 0.0
        %388 = vmatpush1.msra.mxu0 0.0
        %389 = vmatprep.subr.mxu0 0.0
        %390 = vmatpush1.msra.mxu0 0.0
        %391 = vmatprep.subr.mxu0 0.0
        %392 = vmatpush1.msra.mxu0 0.0
        %393 = vmatprep.subr.mxu0 0.0
        %394 = vmatpush1.msra.mxu0 0.0
        %395 = vmatprep.subr.mxu0 0.0
        %396 = vmatpush1.msra.mxu0 0.0
        %397 = vmatprep.subr.mxu0 0.0
        %398 = vmatpush1.msra.mxu0 0.0
        %399 = vmatprep.subr.mxu0 0.0
        %400 = vmatpush1.msra.mxu0 0.0
        %401 = vmatprep.subr.mxu0 0.0
        %402 = vmatpush1.msra.mxu0 0.0
        %403 = vmatprep.subr.mxu0 0.0
        %404 = vmatpush1.msra.mxu0 0.0
        %405 = vmatprep.subr.mxu0 0.0
        %406 = vmatpush1.msra.mxu0 0.0
        %407 = vmatprep.subr.mxu0 0.0
        %408 = vmatpush1.msra.mxu0 0.0
        %409 = vmatprep.subr.mxu0 0.0
        %410 = vmatpush1.msra.mxu0 0.0
        %411 = vmatprep.subr.mxu0 0.0
        %412 = vmatpush1.msra.mxu0 0.0
        %413 = vmatprep.subr.mxu0 0.0
        %414 = vmatpush1.msra.mxu0 0.0
        %415 = vmatprep.subr.mxu0 0.0
        %416 = vmatpush1.msra.mxu0 0.0
        %417 = vmatprep.subr.mxu0 0.0
        %418 = vmatpush1.msra.mxu0 0.0
        %419 = vmatprep.subr.mxu0 0.0
        %420 = vmatpush1.msra.mxu0 0.0
        %421 = vmatprep.subr.mxu0 0.0
        %422 = vmatpush1.msra.mxu0 0.0
        %423 = vmatprep.subr.mxu0 0.0
        %424 = vmatpush1.msra.mxu0 0.0
        %425 = vmatprep.subr.mxu0 0.0
        %426 = vmatpush1.msra.mxu0 0.0
        %427 = vmatprep.subr.mxu0 0.0
        %428 = vmatpush1.msra.mxu0 0.0
        %429 = vmatprep.mubr.f32.mxu0 0.0
        %430 = vmatmul.mubr.f32.gmra.mrb[0].mxu0 %v342
        %v431 = vpop.f32.mrb[0].mxu0
        %v432 = vadd.f32 %v338, %v431
        %v433 = vpop.f32.mrb[0].mxu0
        %434 = vmatprep.mubr.f32.mxu0 0.0
        %435 = vmatmul.mubr.f32.gmra.mrb[0].mxu0 %v345
        %v436 = vpop.f32.mrb[0].mxu0
        %v437 = vadd.f32 %v338, %v436
        %v438 = vpop.f32.mrb[0].mxu0
        %439 = vmatprep.mubr.f32.mxu0 0.0
        %440 = vmatmul.mubr.f32.gmra.mrb[0].mxu0 %v348
        %v441 = vpop.f32.mrb[0].mxu0
        %v442 = vadd.f32 %v338, %v441
        %v443 = vpop.f32.mrb[0].mxu0
        %444 = vmatprep.mubr.f32.mxu0 0.0
        %445 = vmatmul.mubr.f32.gmra.mrb[0].mxu0 %v351
        %v446 = vpop.f32.mrb[0].mxu0
        %v447 = vadd.f32 %v338, %v446
        %v448 = vpop.f32.mrb[0].mxu0
        %449 = vmatprep.mubr.f32.mxu0 0.0
        %450 = vmatmul.mubr.f32.gmra.mrb[0].mxu0 %v354
        %v451 = vpop.f32.mrb[0].mxu0
        %v452 = vadd.f32 %v338, %v451
        %v453 = vpop.f32.mrb[0].mxu0
        %454 = vmatprep.mubr.f32.mxu0 0.0
        %455 = vmatmul.mubr.f32.gmra.mrb[0].mxu0 %v357
        %v456 = vpop.f32.mrb[0].mxu0
        %v457 = vadd.f32 %v338, %v456
        %v458 = vpop.f32.mrb[0].mxu0
        %459 = vmatprep.mubr.f32.mxu0 0.0
        %460 = vmatmul.mubr.f32.gmra.mrb[0].mxu0 %v360
        %v461 = vpop.f32.mrb[0].mxu0
        %v462 = vadd.f32 %v338, %v461
        %v463 = vpop.f32.mrb[0].mxu0
        %464 = vmatprep.mubr.f32.mxu0 0.0
        %465 = vmatmul.mubr.f32.gmra.mrb[0].mxu0 %v363
        %v466 = vpop.f32.mrb[0].mxu0
        %v467 = vadd.f32 %v338, %v466
        %v468 = vpop.f32.mrb[0].mxu0
        %469 = vdwg.mxu0
        %vm470 = vcmp.ge.f32.partialorder %v432, 0.0
        %vm471 = vcmp.ge.f32.partialorder %v437, 0.0
        %vm472 = vcmp.ge.f32.partialorder %v442, 0.0
        %vm473 = vcmp.ge.f32.partialorder %v447, 0.0
        %vm474 = vcmp.ge.f32.partialorder %v452, 0.0
        %vm475 = vcmp.ge.f32.partialorder %v457, 0.0
        %vm476 = vcmp.ge.f32.partialorder %v462, 0.0
        %vm477 = vcmp.ge.f32.partialorder %v467, 0.0
        %v478 = vmul.f32 %v432, 0.1
        %v479 = vmul.f32 %v437, 0.1
        %v480 = vmul.f32 %v442, 0.1
        %v481 = vmul.f32 %v447, 0.1
        %v482 = vmul.f32 %v452, 0.1
        %v483 = vmul.f32 %v457, 0.1
        %v484 = vmul.f32 %v462, 0.1
        %v485 = vmul.f32 %v467, 0.1
        %v486 = vsel %vm470, %v432, %v478
        %v487 = vsel %vm471, %v437, %v479
        %v488 = vsel %vm472, %v442, %v480
        %v489 = vsel %vm473, %v447, %v481
        %v490 = vsel %vm474, %v452, %v482
        %v491 = vsel %vm475, %v457, %v483
        %v492 = vsel %vm476, %v462, %v484
        %v493 = vsel %vm477, %v467, %v485
        %v494 = vld [vmem:[%s3] sm:$0xff]
        %v495 = vld [vmem:[%s3 + $0x8] sm:$0xff]
        %v496 = vld [vmem:[%s3 + $0x10] sm:$0xff]
        %v497 = vld [vmem:[%s3 + $0x18] sm:$0xff]
        %v498 = vld [vmem:[%s3 + $0x20] sm:$0xff]
        %v499 = vld [vmem:[%s3 + $0x28] sm:$0xff]
        %v500 = vld [vmem:[%s3 + $0x30] sm:$0xff]
        %v501 = vld [vmem:[%s3 + $0x38] sm:$0xff]
        %v502 = vld [vmem:[%s4] sm:$0x1]
        %v504 = vlaneseq
        %v505 = vshrl.u32 %v504, 7
        %v506 = vsub.s32 0, %v505
        %v507 = vrot.slane %v502, %v506
        %vm509 = vcmask 523264
        %v511 = vsel %vm509, %v486, 0
        %v514 = vsel %vm509, %v487, 0
        %v517 = vsel %vm509, %v488, 0
        %v520 = vsel %vm509, %v489, 0
        %v523 = vsel %vm509, %v490, 0
        %v526 = vsel %vm509, %v491, 0
        %v529 = vsel %vm509, %v492, 0
        %v532 = vsel %vm509, %v493, 0
        %534 = vmatprep.subr.mxu0 0.0
        %535 = vmatpush1.msra.mxu0 %v494
        %536 = vmatprep.subr.mxu0 0.0
        %537 = vmatpush1.msra.mxu0 %v495
        %538 = vmatprep.subr.mxu0 0.0
        %539 = vmatpush1.msra.mxu0 %v496
        %540 = vmatprep.subr.mxu0 0.0
        %541 = vmatpush1.msra.mxu0 %v497
        %542 = vmatprep.subr.mxu0 0.0
        %543 = vmatpush1.msra.mxu0 %v498
        %544 = vmatprep.subr.mxu0 0.0
        %545 = vmatpush1.msra.mxu0 %v499
        %546 = vmatprep.subr.mxu0 0.0
        %547 = vmatpush1.msra.mxu0 %v500
        %548 = vmatprep.subr.mxu0 0.0
        %549 = vmatpush1.msra.mxu0 %v501
        %550 = vmatprep.subr.mxu0 0.0
        %551 = vmatpush1.msra.mxu0 0.0
        %552 = vmatprep.subr.mxu0 0.0
        %553 = vmatpush1.msra.mxu0 0.0
        %554 = vmatprep.subr.mxu0 0.0
        %555 = vmatpush1.msra.mxu0 0.0
        %556 = vmatprep.subr.mxu0 0.0
        %557 = vmatpush1.msra.mxu0 0.0
        %558 = vmatprep.subr.mxu0 0.0
        %559 = vmatpush1.msra.mxu0 0.0
        %560 = vmatprep.subr.mxu0 0.0
        %561 = vmatpush1.msra.mxu0 0.0
        %562 = vmatprep.subr.mxu0 0.0
        %563 = vmatpush1.msra.mxu0 0.0
        %564 = vmatprep.subr.mxu0 0.0
        %565 = vmatpush1.msra.mxu0 0.0
        %566 = vmatprep.subr.mxu0 0.0
        %567 = vmatpush1.msra.mxu0 0.0
        %568 = vmatprep.subr.mxu0 0.0
        %569 = vmatpush1.msra.mxu0 0.0
        %570 = vmatprep.subr.mxu0 0.0
        %571 = vmatpush1.msra.mxu0 0.0
        %572 = vmatprep.subr.mxu0 0.0
        %573 = vmatpush1.msra.mxu0 0.0
        %574 = vmatprep.subr.mxu0 0.0
        %575 = vmatpush1.msra.mxu0 0.0
        %576 = vmatprep.subr.mxu0 0.0
        %577 = vmatpush1.msra.mxu0 0.0
        %578 = vmatprep.subr.mxu0 0.0
        %579 = vmatpush1.msra.mxu0 0.0
        %580 = vmatprep.subr.mxu0 0.0
        %581 = vmatpush1.msra.mxu0 0.0
        %582 = vmatprep.subr.mxu0 0.0
        %583 = vmatpush1.msra.mxu0 0.0
        %584 = vmatprep.subr.mxu0 0.0
        %585 = vmatpush1.msra.mxu0 0.0
        %586 = vmatprep.subr.mxu0 0.0
        %587 = vmatpush1.msra.mxu0 0.0
        %588 = vmatprep.subr.mxu0 0.0
        %589 = vmatpush1.msra.mxu0 0.0
        %590 = vmatprep.subr.mxu0 0.0
        %591 = vmatpush1.msra.mxu0 0.0
        %592 = vmatprep.subr.mxu0 0.0
        %593 = vmatpush1.msra.mxu0 0.0
        %594 = vmatprep.subr.mxu0 0.0
        %595 = vmatpush1.msra.mxu0 0.0
        %596 = vmatprep.subr.mxu0 0.0
        %597 = vmatpush1.msra.mxu0 0.0
        %598 = vmatprep.mubr.f32.mxu0 0.0
        %599 = vmatmul.mubr.f32.gmra.mrb[0].mxu0 %v511
        %v600 = vpop.f32.mrb[0].mxu0
        %v601 = vadd.f32 %v507, %v600
        %v602 = vpop.f32.mrb[0].mxu0
        %603 = vmatprep.mubr.f32.mxu0 0.0
        %604 = vmatmul.mubr.f32.gmra.mrb[0].mxu0 %v514
        %v605 = vpop.f32.mrb[0].mxu0
        %v606 = vadd.f32 %v507, %v605
        %v607 = vpop.f32.mrb[0].mxu0
        %608 = vmatprep.mubr.f32.mxu0 0.0
        %609 = vmatmul.mubr.f32.gmra.mrb[0].mxu0 %v517
        %v610 = vpop.f32.mrb[0].mxu0
        %v611 = vadd.f32 %v507, %v610
        %v612 = vpop.f32.mrb[0].mxu0
        %613 = vmatprep.mubr.f32.mxu0 0.0
        %614 = vmatmul.mubr.f32.gmra.mrb[0].mxu0 %v520
        %v615 = vpop.f32.mrb[0].mxu0
        %v616 = vadd.f32 %v507, %v615
        %v617 = vpop.f32.mrb[0].mxu0
        %618 = vmatprep.mubr.f32.mxu0 0.0
        %619 = vmatmul.mubr.f32.gmra.mrb[0].mxu0 %v523
        %v620 = vpop.f32.mrb[0].mxu0
        %v621 = vadd.f32 %v507, %v620
        %v622 = vpop.f32.mrb[0].mxu0
        %623 = vmatprep.mubr.f32.mxu0 0.0
        %624 = vmatmul.mubr.f32.gmra.mrb[0].mxu0 %v526
        %v625 = vpop.f32.mrb[0].mxu0
        %v626 = vadd.f32 %v507, %v625
        %v627 = vpop.f32.mrb[0].mxu0
        %628 = vmatprep.mubr.f32.mxu0 0.0
        %629 = vmatmul.mubr.f32.gmra.mrb[0].mxu0 %v529
        %v630 = vpop.f32.mrb[0].mxu0
        %v631 = vadd.f32 %v507, %v630
        %v632 = vpop.f32.mrb[0].mxu0
        %633 = vmatprep.mubr.f32.mxu0 0.0
        %634 = vmatmul.mubr.f32.gmra.mrb[0].mxu0 %v532
        %v635 = vpop.f32.mrb[0].mxu0
        %v636 = vadd.f32 %v507, %v635
        %v637 = vpop.f32.mrb[0].mxu0
        %638 = vdwg.mxu0
        %vm639 = vcmp.ge.f32.partialorder %v601, 0.0
        %vm640 = vcmp.ge.f32.partialorder %v606, 0.0
        %vm641 = vcmp.ge.f32.partialorder %v611, 0.0
        %vm642 = vcmp.ge.f32.partialorder %v616, 0.0
        %vm643 = vcmp.ge.f32.partialorder %v621, 0.0
        %vm644 = vcmp.ge.f32.partialorder %v626, 0.0
        %vm645 = vcmp.ge.f32.partialorder %v631, 0.0
        %vm646 = vcmp.ge.f32.partialorder %v636, 0.0
        %v647 = vmul.f32 %v601, 0.1
        %v648 = vmul.f32 %v606, 0.1
        %v649 = vmul.f32 %v611, 0.1
        %v650 = vmul.f32 %v616, 0.1
        %v651 = vmul.f32 %v621, 0.1
        %v652 = vmul.f32 %v626, 0.1
        %v653 = vmul.f32 %v631, 0.1
        %v654 = vmul.f32 %v636, 0.1
        %v655 = vsel %vm639, %v601, %v647
        %v656 = vsel %vm640, %v606, %v648
        %v657 = vsel %vm641, %v611, %v649
        %v658 = vsel %vm642, %v616, %v650
        %v659 = vsel %vm643, %v621, %v651
        %v660 = vsel %vm644, %v626, %v652
        %v661 = vsel %vm645, %v631, %v653
        %v662 = vsel %vm646, %v636, %v654
        %v663 = vld [vmem:[%s5] sm:$0xff]
        %v664 = vld [vmem:[%s5 + $0x8] sm:$0xff]
        %v665 = vld [vmem:[%s5 + $0x10] sm:$0xff]
        %v666 = vld [vmem:[%s5 + $0x18] sm:$0xff]
        %v667 = vld [vmem:[%s5 + $0x20] sm:$0xff]
        %v668 = vld [vmem:[%s5 + $0x28] sm:$0xff]
        %v669 = vld [vmem:[%s5 + $0x30] sm:$0xff]
        %v670 = vld [vmem:[%s5 + $0x38] sm:$0xff]
        %v671 = vld [vmem:[%s5 + $0x40] sm:$0xff]
        %v672 = vld [vmem:[%s5 + $0x48] sm:$0xff]
        %v673 = vld [vmem:[%s5 + $0x50] sm:$0xff]
        %v674 = vld [vmem:[%s5 + $0x58] sm:$0xff]
        %v675 = vld [vmem:[%s5 + $0x60] sm:$0xff]
        %v676 = vld [vmem:[%s5 + $0x68] sm:$0xff]
        %v677 = vld [vmem:[%s5 + $0x70] sm:$0xff]
        %v678 = vld [vmem:[%s5 + $0x78] sm:$0xff]
        %v679 = vld [vmem:[%s6] sm:$0x1]
        %v681 = vlaneseq
        %v682 = vshrl.u32 %v681, 7
        %v683 = vsub.s32 0, %v682
        %v684 = vrot.slane %v679, %v683
        %686 = vmatprep.subr.mxu0 0.0
        %687 = vmatpush1.msra.mxu0 %v663
        %688 = vmatprep.subr.mxu0 0.0
        %689 = vmatpush1.msra.mxu0 %v664
        %690 = vmatprep.subr.mxu0 0.0
        %691 = vmatpush1.msra.mxu0 %v665
        %692 = vmatprep.subr.mxu0 0.0
        %693 = vmatpush1.msra.mxu0 %v666
        %694 = vmatprep.subr.mxu0 0.0
        %695 = vmatpush1.msra.mxu0 %v667
        %696 = vmatprep.subr.mxu0 0.0
        %697 = vmatpush1.msra.mxu0 %v668
        %698 = vmatprep.subr.mxu0 0.0
        %699 = vmatpush1.msra.mxu0 %v669
        %700 = vmatprep.subr.mxu0 0.0
        %701 = vmatpush1.msra.mxu0 %v670
        %702 = vmatprep.subr.mxu0 0.0
        %703 = vmatpush1.msra.mxu0 %v671
        %704 = vmatprep.subr.mxu0 0.0
        %705 = vmatpush1.msra.mxu0 %v672
        %706 = vmatprep.subr.mxu0 0.0
        %707 = vmatpush1.msra.mxu0 %v673
        %708 = vmatprep.subr.mxu0 0.0
        %709 = vmatpush1.msra.mxu0 %v674
        %710 = vmatprep.subr.mxu0 0.0
        %711 = vmatpush1.msra.mxu0 %v675
        %712 = vmatprep.subr.mxu0 0.0
        %713 = vmatpush1.msra.mxu0 %v676
        %714 = vmatprep.subr.mxu0 0.0
        %715 = vmatpush1.msra.mxu0 %v677
        %716 = vmatprep.subr.mxu0 0.0
        %717 = vmatpush1.msra.mxu0 %v678
        %718 = vmatprep.subr.mxu0 0.0
        %719 = vmatpush1.msra.mxu0 0.0
        %720 = vmatprep.subr.mxu0 0.0
        %721 = vmatpush1.msra.mxu0 0.0
        %722 = vmatprep.subr.mxu0 0.0
        %723 = vmatpush1.msra.mxu0 0.0
        %724 = vmatprep.subr.mxu0 0.0
        %725 = vmatpush1.msra.mxu0 0.0
        %726 = vmatprep.subr.mxu0 0.0
        %727 = vmatpush1.msra.mxu0 0.0
        %728 = vmatprep.subr.mxu0 0.0
        %729 = vmatpush1.msra.mxu0 0.0
        %730 = vmatprep.subr.mxu0 0.0
        %731 = vmatpush1.msra.mxu0 0.0
        %732 = vmatprep.subr.mxu0 0.0
        %733 = vmatpush1.msra.mxu0 0.0
        %734 = vmatprep.subr.mxu0 0.0
        %735 = vmatpush1.msra.mxu0 0.0
        %736 = vmatprep.subr.mxu0 0.0
        %737 = vmatpush1.msra.mxu0 0.0
        %738 = vmatprep.subr.mxu0 0.0
        %739 = vmatpush1.msra.mxu0 0.0
        %740 = vmatprep.subr.mxu0 0.0
        %741 = vmatpush1.msra.mxu0 0.0
        %742 = vmatprep.subr.mxu0 0.0
        %743 = vmatpush1.msra.mxu0 0.0
        %744 = vmatprep.subr.mxu0 0.0
        %745 = vmatpush1.msra.mxu0 0.0
        %746 = vmatprep.subr.mxu0 0.0
        %747 = vmatpush1.msra.mxu0 0.0
        %748 = vmatprep.subr.mxu0 0.0
        %749 = vmatpush1.msra.mxu0 0.0
        %750 = vmatprep.mubr.f32.mxu0 0.0
        %751 = vmatmul.mubr.f32.gmra.mrb[0].mxu0 %v655
        %v752 = vpop.f32.mrb[0].mxu0
        %v753 = vadd.f32 %v684, %v752
        %v754 = vpop.f32.mrb[0].mxu0
        %755 = vmatprep.mubr.f32.mxu0 0.0
        %756 = vmatmul.mubr.f32.gmra.mrb[0].mxu0 %v656
        %v757 = vpop.f32.mrb[0].mxu0
        %v758 = vadd.f32 %v684, %v757
        %v759 = vpop.f32.mrb[0].mxu0
        %760 = vmatprep.mubr.f32.mxu0 0.0
        %761 = vmatmul.mubr.f32.gmra.mrb[0].mxu0 %v657
        %v762 = vpop.f32.mrb[0].mxu0
        %v763 = vadd.f32 %v684, %v762
        %v764 = vpop.f32.mrb[0].mxu0
        %765 = vmatprep.mubr.f32.mxu0 0.0
        %766 = vmatmul.mubr.f32.gmra.mrb[0].mxu0 %v658
        %v767 = vpop.f32.mrb[0].mxu0
        %v768 = vadd.f32 %v684, %v767
        %v769 = vpop.f32.mrb[0].mxu0
        %770 = vmatprep.mubr.f32.mxu0 0.0
        %771 = vmatmul.mubr.f32.gmra.mrb[0].mxu0 %v659
        %v772 = vpop.f32.mrb[0].mxu0
        %v773 = vadd.f32 %v684, %v772
        %v774 = vpop.f32.mrb[0].mxu0
        %775 = vmatprep.mubr.f32.mxu0 0.0
        %776 = vmatmul.mubr.f32.gmra.mrb[0].mxu0 %v660
        %v777 = vpop.f32.mrb[0].mxu0
        %v778 = vadd.f32 %v684, %v777
        %v779 = vpop.f32.mrb[0].mxu0
        %780 = vmatprep.mubr.f32.mxu0 0.0
        %781 = vmatmul.mubr.f32.gmra.mrb[0].mxu0 %v661
        %v782 = vpop.f32.mrb[0].mxu0
        %v783 = vadd.f32 %v684, %v782
        %v784 = vpop.f32.mrb[0].mxu0
        %785 = vmatprep.mubr.f32.mxu0 0.0
        %786 = vmatmul.mubr.f32.gmra.mrb[0].mxu0 %v662
        %v787 = vpop.f32.mrb[0].mxu0
        %v788 = vadd.f32 %v684, %v787
        %v789 = vpop.f32.mrb[0].mxu0
        %790 = vdwg.mxu0
        %v791 = vxor.u32 %v753, 2147483648
        %v792 = vxor.u32 %v758, 2147483648
        %v793 = vxor.u32 %v763, 2147483648
        %v794 = vxor.u32 %v768, 2147483648
        %v795 = vxor.u32 %v773, 2147483648
        %v796 = vxor.u32 %v778, 2147483648
        %v797 = vxor.u32 %v783, 2147483648
        %v798 = vxor.u32 %v788, 2147483648
        %v799 = vmul.f32 %v791, 1.442695
        %v800 = vpow.pop %v799
        %v801 = vmul.f32 %v792, 1.442695
        %v802 = vpow.pop %v801
        %v803 = vmul.f32 %v793, 1.442695
        %v804 = vpow.pop %v803
        %v805 = vmul.f32 %v794, 1.442695
        %v806 = vpow.pop %v805
        %v807 = vmul.f32 %v795, 1.442695
        %v808 = vpow.pop %v807
        %v809 = vmul.f32 %v796, 1.442695
        %v810 = vpow.pop %v809
        %v811 = vmul.f32 %v797, 1.442695
        %v812 = vpow.pop %v811
        %v813 = vmul.f32 %v798, 1.442695
        %v814 = vpow.pop %v813
        %v815 = vadd.f32 %v800, 1.0
        %v816 = vadd.f32 %v802, 1.0
        %v817 = vadd.f32 %v804, 1.0
        %v818 = vadd.f32 %v806, 1.0
        %v819 = vadd.f32 %v808, 1.0
        %v820 = vadd.f32 %v810, 1.0
        %v821 = vadd.f32 %v812, 1.0
        %v822 = vadd.f32 %v814, 1.0
        %v823 = vrcp.pop %v815
        %v824 = vmul.f32 1.0, %v823
        %v825 = vrcp.pop %v816
        %v826 = vmul.f32 1.0, %v825
        %v827 = vrcp.pop %v817
        %v828 = vmul.f32 1.0, %v827
        %v829 = vrcp.pop %v818
        %v830 = vmul.f32 1.0, %v829
        %v831 = vrcp.pop %v819
        %v832 = vmul.f32 1.0, %v831
        %v833 = vrcp.pop %v820
        %v834 = vmul.f32 1.0, %v833
        %v835 = vrcp.pop %v821
        %v836 = vmul.f32 1.0, %v835
        %v837 = vrcp.pop %v822
        %v838 = vmul.f32 1.0, %v837
        %vm839 = vcmask 125952
        %840 = vst.msk [vmem:[#allocation2] sm:$0xf] %vm839, %v824
        %v842 = vcombine.high %v824, %v824
        %843 = vrot.lane.b32.xlu0 %v842, 16
        %v844 = vpop.permute.xlu0 %843
        %vm846 = vcmask 257152
        %847 = vst.msk [vmem:[#allocation2] sm:$0xf] %vm846, %v844
        %849 = vrot.lane.b32.xlu0 %v826, 32
        %v850 = vpop.permute.xlu0 %849
        %vm852 = vcmask 388352
        %853 = vst.msk [vmem:[#allocation2] sm:$0xf] %vm852, %v850
        %v854 = vcombine.high %v826, %v826
        %855 = vrot.lane.b32.xlu0 %v854, 48
        %v856 = vpop.permute.xlu0 %855
        %vm858 = vcmask 519552
        %859 = vst.msk [vmem:[#allocation2] sm:$0xf] %vm858, %v856
        %861 = vrot.lane.b32.xlu0 %v828, 64
        %v862 = vpop.permute.xlu0 %861
        %vm864 = vcmask 650752
        %865 = vst.msk [vmem:[#allocation2] sm:$0xf] %vm864, %v862
        %v866 = vcombine.high %v828, %v828
        %867 = vrot.lane.b32.xlu0 %v866, 80
        %v868 = vpop.permute.xlu0 %867
        %vm870 = vcmask 781952
        %871 = vst.msk [vmem:[#allocation2] sm:$0xf] %vm870, %v868
        %873 = vrot.lane.b32.xlu0 %v830, 96
        %v874 = vpop.permute.xlu0 %873
        %vm876 = vcmask 913152
        %877 = vst.msk [vmem:[#allocation2] sm:$0xf] %vm876, %v874
        %v878 = vcombine.high %v830, %v830
        %879 = vrot.lane.b32.xlu0 %v878, 112
        %v880 = vpop.permute.xlu0 %879
        %vm882 = vcmask 1044352
        %883 = vst.msk [vmem:[#allocation2] sm:$0xf] %vm882, %v880
        %884 = vst.msk [vmem:[#allocation2 + $0x4] sm:$0xf] %vm839, %v832
        %v886 = vcombine.high %v832, %v832
        %887 = vrot.lane.b32.xlu0 %v886, 16
        %v888 = vpop.permute.xlu0 %887
        %890 = vst.msk [vmem:[#allocation2 + $0x4] sm:$0xf] %vm846, %v888
        %892 = vrot.lane.b32.xlu0 %v834, 32
        %v893 = vpop.permute.xlu0 %892
        %895 = vst.msk [vmem:[#allocation2 + $0x4] sm:$0xf] %vm852, %v893
        %v896 = vcombine.high %v834, %v834
        %897 = vrot.lane.b32.xlu0 %v896, 48
        %v898 = vpop.permute.xlu0 %897
        %900 = vst.msk [vmem:[#allocation2 + $0x4] sm:$0xf] %vm858, %v898
        %902 = vrot.lane.b32.xlu0 %v836, 64
        %v903 = vpop.permute.xlu0 %902
        %905 = vst.msk [vmem:[#allocation2 + $0x4] sm:$0xf] %vm864, %v903
        %v906 = vcombine.high %v836, %v836
        %907 = vrot.lane.b32.xlu0 %v906, 80
        %v908 = vpop.permute.xlu0 %907
        %910 = vst.msk [vmem:[#allocation2 + $0x4] sm:$0xf] %vm870, %v908
        %912 = vrot.lane.b32.xlu0 %v838, 96
        %v913 = vpop.permute.xlu0 %912
        %915 = vst.msk [vmem:[#allocation2 + $0x4] sm:$0xf] %vm876, %v913
        %v916 = vcombine.high %v838, %v838
        %917 = vrot.lane.b32.xlu0 %v916, 112
        %v918 = vpop.permute.xlu0 %917
        %920 = vst.msk [vmem:[#allocation2 + $0x4] sm:$0xf] %vm882, %v918
        %v921 = vld [vmem:[#allocation2] sm:$0xff]
        %v922 = vld [vmem:[#allocation3] sm:$0xff]
        %v923 = vld [vmem:[#allocation3 + $0x8] sm:$0xff]
        %v924 = vld [vmem:[#allocation3 + $0x10] sm:$0xff]
        %v925 = vld [vmem:[#allocation3 + $0x18] sm:$0xff]
        %v926 = vld [vmem:[#allocation3 + $0x20] sm:$0xff]
        %v927 = vld [vmem:[#allocation3 + $0x28] sm:$0xff]
        %v928 = vld [vmem:[#allocation3 + $0x30] sm:$0xff]
        %v929 = vld [vmem:[#allocation3 + $0x38] sm:$0xff]
        %v930 = vld [vmem:[#allocation3 + $0x40] sm:$0xff]
        %v931 = vld [vmem:[#allocation3 + $0x48] sm:$0xff]
        %v932 = vld [vmem:[#allocation3 + $0x50] sm:$0xff]
        %v933 = vld [vmem:[#allocation3 + $0x58] sm:$0xff]
        %v934 = vld [vmem:[#allocation3 + $0x60] sm:$0xff]
        %v935 = vld [vmem:[#allocation3 + $0x68] sm:$0xff]
        %v936 = vld [vmem:[#allocation3 + $0x70] sm:$0xff]
        %v937 = vld [vmem:[#allocation3 + $0x78] sm:$0xff]
        %v938 = vld [vmem:[#allocation3 + $0x80] sm:$0xff]
        %v939 = vld [vmem:[#allocation3 + $0x88] sm:$0xff]
        %v940 = vld [vmem:[#allocation3 + $0x90] sm:$0xff]
        %v941 = vld [vmem:[#allocation3 + $0x98] sm:$0xff]
        %v942 = vld [vmem:[#allocation3 + $0xa0] sm:$0xff]
        %v943 = vld [vmem:[#allocation3 + $0xa8] sm:$0xff]
        %v944 = vld [vmem:[#allocation3 + $0xb0] sm:$0xff]
        %v945 = vld [vmem:[#allocation3 + $0xb8] sm:$0xff]
        %v946 = vld [vmem:[#allocation3 + $0xc0] sm:$0xff]
        %v947 = vld [vmem:[#allocation3 + $0xc8] sm:$0xff]
        %v948 = vld [vmem:[#allocation3 + $0xd0] sm:$0xff]
        %v949 = vld [vmem:[#allocation3 + $0xd8] sm:$0xff]
        %v950 = vld [vmem:[#allocation3 + $0xe0] sm:$0xff]
        %v951 = vld [vmem:[#allocation3 + $0xe8] sm:$0xff]
        %v952 = vld [vmem:[#allocation3 + $0xf0] sm:$0xff]
        %v953 = vld [vmem:[#allocation3 + $0xf8] sm:$0xff]
        %v954 = vld [vmem:[#allocation3 + $0x100] sm:$0xff]
        %v955 = vld [vmem:[#allocation3 + $0x108] sm:$0xff]
        %v956 = vld [vmem:[#allocation3 + $0x110] sm:$0xff]
        %v957 = vld [vmem:[#allocation3 + $0x118] sm:$0xff]
        %v958 = vld [vmem:[#allocation3 + $0x120] sm:$0xff]
        %v959 = vld [vmem:[#allocation3 + $0x128] sm:$0xff]
        %v960 = vld [vmem:[#allocation3 + $0x130] sm:$0xff]
        %v961 = vld [vmem:[#allocation3 + $0x138] sm:$0xff]
        %v962 = vld [vmem:[#allocation3 + $0x140] sm:$0xff]
        %v963 = vld [vmem:[#allocation3 + $0x148] sm:$0xff]
        %v964 = vld [vmem:[#allocation3 + $0x150] sm:$0xff]
        %v965 = vld [vmem:[#allocation3 + $0x158] sm:$0xff]
        %v966 = vld [vmem:[#allocation3 + $0x160] sm:$0xff]
        %v967 = vld [vmem:[#allocation3 + $0x168] sm:$0xff]
        %v968 = vld [vmem:[#allocation3 + $0x170] sm:$0xff]
        %v969 = vld [vmem:[#allocation3 + $0x178] sm:$0xff]
        %v970 = vld [vmem:[#allocation3 + $0x180] sm:$0xff]
        %v971 = vld [vmem:[#allocation3 + $0x188] sm:$0xff]
        %v972 = vld [vmem:[#allocation3 + $0x190] sm:$0xff]
        %v973 = vld [vmem:[#allocation3 + $0x198] sm:$0xff]
        %v974 = vld [vmem:[#allocation3 + $0x1a0] sm:$0xff]
        %v975 = vld [vmem:[#allocation3 + $0x1a8] sm:$0xff]
        %v976 = vld [vmem:[#allocation3 + $0x1b0] sm:$0xff]
        %v977 = vld [vmem:[#allocation3 + $0x1b8] sm:$0xff]
        %v978 = vld [vmem:[#allocation3 + $0x1c0] sm:$0xff]
        %v979 = vld [vmem:[#allocation3 + $0x1c8] sm:$0xff]
        %v980 = vld [vmem:[#allocation3 + $0x1d0] sm:$0xff]
        %v981 = vld [vmem:[#allocation3 + $0x1d8] sm:$0xff]
        %v982 = vld [vmem:[#allocation3 + $0x1e0] sm:$0xff]
        %v983 = vld [vmem:[#allocation3 + $0x1e8] sm:$0xff]
        %v984 = vld [vmem:[#allocation3 + $0x1f0] sm:$0xff]
        %v985 = vld [vmem:[#allocation3 + $0x1f8] sm:$0xff]
        %v986 = vld [vmem:[#allocation3 + $0x200] sm:$0xff]
        %v987 = vld [vmem:[#allocation3 + $0x208] sm:$0xff]
        %v988 = vld [vmem:[#allocation3 + $0x210] sm:$0xff]
        %v989 = vld [vmem:[#allocation3 + $0x218] sm:$0xff]
        %v990 = vld [vmem:[#allocation3 + $0x220] sm:$0xff]
        %v991 = vld [vmem:[#allocation3 + $0x228] sm:$0xff]
        %v992 = vld [vmem:[#allocation3 + $0x230] sm:$0xff]
        %v993 = vld [vmem:[#allocation3 + $0x238] sm:$0xff]
        %v994 = vld [vmem:[#allocation3 + $0x240] sm:$0xff]
        %v995 = vld [vmem:[#allocation3 + $0x248] sm:$0xff]
        %v996 = vld [vmem:[#allocation3 + $0x250] sm:$0xff]
        %v997 = vld [vmem:[#allocation3 + $0x258] sm:$0xff]
        %v998 = vld [vmem:[#allocation3 + $0x260] sm:$0xff]
        %v999 = vld [vmem:[#allocation3 + $0x268] sm:$0xff]
        %v1000 = vld [vmem:[#allocation3 + $0x270] sm:$0xff]
        %v1001 = vld [vmem:[#allocation3 + $0x278] sm:$0xff]
        %v1002 = vld [vmem:[#allocation3 + $0x280] sm:$0xff]
        %v1003 = vld [vmem:[#allocation3 + $0x288] sm:$0xff]
        %v1004 = vld [vmem:[#allocation3 + $0x290] sm:$0xff]
        %v1005 = vld [vmem:[#allocation3 + $0x298] sm:$0xff]
        %v1006 = vld [vmem:[#allocation3 + $0x2a0] sm:$0xff]
        %v1007 = vld [vmem:[#allocation3 + $0x2a8] sm:$0xff]
        %v1008 = vld [vmem:[#allocation3 + $0x2b0] sm:$0xff]
        %v1009 = vld [vmem:[#allocation3 + $0x2b8] sm:$0xff]
        %v1010 = vld [vmem:[#allocation3 + $0x2c0] sm:$0xff]
        %v1011 = vld [vmem:[#allocation3 + $0x2c8] sm:$0xff]
        %v1012 = vld [vmem:[#allocation3 + $0x2d0] sm:$0xff]
        %v1013 = vld [vmem:[#allocation3 + $0x2d8] sm:$0xff]
        %v1014 = vld [vmem:[#allocation3 + $0x2e0] sm:$0xff]
        %v1015 = vld [vmem:[#allocation3 + $0x2e8] sm:$0xff]
        %v1016 = vld [vmem:[#allocation3 + $0x2f0] sm:$0xff]
        %v1017 = vld [vmem:[#allocation3 + $0x2f8] sm:$0xff]
        %v1018 = vld [vmem:[#allocation3 + $0x300] sm:$0xff]
        %v1019 = vld [vmem:[#allocation3 + $0x308] sm:$0xff]
        %v1020 = vld [vmem:[#allocation3 + $0x310] sm:$0xff]
        %v1021 = vld [vmem:[#allocation3 + $0x318] sm:$0xff]
        %v1022 = vld [vmem:[#allocation3 + $0x320] sm:$0xff]
        %v1023 = vld [vmem:[#allocation3 + $0x328] sm:$0xff]
        %v1024 = vld [vmem:[#allocation3 + $0x330] sm:$0xff]
        %v1025 = vld [vmem:[#allocation3 + $0x338] sm:$0xff]
        %v1026 = vld [vmem:[#allocation3 + $0x340] sm:$0xff]
        %v1027 = vld [vmem:[#allocation3 + $0x348] sm:$0xff]
        %v1028 = vld [vmem:[#allocation3 + $0x350] sm:$0xff]
        %v1029 = vld [vmem:[#allocation3 + $0x358] sm:$0xff]
        %v1030 = vld [vmem:[#allocation3 + $0x360] sm:$0xff]
        %v1031 = vld [vmem:[#allocation3 + $0x368] sm:$0xff]
        %v1032 = vld [vmem:[#allocation3 + $0x370] sm:$0xff]
        %v1033 = vld [vmem:[#allocation3 + $0x378] sm:$0xff]
        %v1034 = vld [vmem:[#allocation3 + $0x380] sm:$0xff]
        %v1035 = vld [vmem:[#allocation3 + $0x388] sm:$0xff]
        %v1036 = vld [vmem:[#allocation3 + $0x390] sm:$0xff]
        %v1037 = vld [vmem:[#allocation3 + $0x398] sm:$0xff]
        %v1038 = vld [vmem:[#allocation3 + $0x3a0] sm:$0xff]
        %v1039 = vld [vmem:[#allocation3 + $0x3a8] sm:$0xff]
        %v1040 = vld [vmem:[#allocation3 + $0x3b0] sm:$0xff]
        %v1041 = vld [vmem:[#allocation3 + $0x3b8] sm:$0xff]
        %v1042 = vld [vmem:[#allocation3 + $0x3c0] sm:$0xff]
        %v1043 = vld [vmem:[#allocation3 + $0x3c8] sm:$0xff]
        %v1044 = vld [vmem:[#allocation3 + $0x3d0] sm:$0xff]
        %v1045 = vld [vmem:[#allocation3 + $0x3d8] sm:$0xff]
        %v1046 = vld [vmem:[#allocation3 + $0x3e0] sm:$0xff]
        %v1047 = vld [vmem:[#allocation3 + $0x3e8] sm:$0xff]
        %v1048 = vld [vmem:[#allocation3 + $0x3f0] sm:$0xff]
        %v1049 = vld [vmem:[#allocation3 + $0x3f8] sm:$0xff]
        %v1050 = vld [vmem:[#allocation3 + $0x400] sm:$0xff]
        %v1051 = vld [vmem:[#allocation3 + $0x408] sm:$0xff]
        %v1052 = vld [vmem:[#allocation3 + $0x410] sm:$0xff]
        %v1053 = vld [vmem:[#allocation3 + $0x418] sm:$0xff]
        %v1054 = vld [vmem:[#allocation3 + $0x420] sm:$0xff]
        %v1055 = vld [vmem:[#allocation3 + $0x428] sm:$0xff]
        %v1056 = vld [vmem:[#allocation3 + $0x430] sm:$0xff]
        %v1057 = vld [vmem:[#allocation3 + $0x438] sm:$0xff]
        %v1058 = vld [vmem:[#allocation3 + $0x440] sm:$0xff]
        %v1059 = vld [vmem:[#allocation3 + $0x448] sm:$0xff]
        %v1060 = vld [vmem:[#allocation3 + $0x450] sm:$0xff]
        %v1061 = vld [vmem:[#allocation3 + $0x458] sm:$0xff]
        %v1062 = vld [vmem:[#allocation3 + $0x460] sm:$0xff]
        %v1063 = vld [vmem:[#allocation3 + $0x468] sm:$0xff]
        %v1064 = vld [vmem:[#allocation3 + $0x470] sm:$0xff]
        %v1065 = vld [vmem:[#allocation3 + $0x478] sm:$0xff]
        %v1066 = vld [vmem:[#allocation3 + $0x480] sm:$0xff]
        %v1067 = vld [vmem:[#allocation3 + $0x488] sm:$0xff]
        %v1068 = vld [vmem:[#allocation3 + $0x490] sm:$0xff]
        %v1069 = vld [vmem:[#allocation3 + $0x498] sm:$0xff]
        %v1070 = vld [vmem:[#allocation3 + $0x4a0] sm:$0xff]
        %v1071 = vld [vmem:[#allocation3 + $0x4a8] sm:$0xff]
        %v1072 = vld [vmem:[#allocation3 + $0x4b0] sm:$0xff]
        %v1073 = vld [vmem:[#allocation3 + $0x4b8] sm:$0xff]
        %v1074 = vld [vmem:[#allocation3 + $0x4c0] sm:$0xff]
        %v1075 = vld [vmem:[#allocation3 + $0x4c8] sm:$0xff]
        %v1076 = vld [vmem:[#allocation3 + $0x4d0] sm:$0xff]
        %v1077 = vld [vmem:[#allocation3 + $0x4d8] sm:$0xff]
        %v1078 = vld [vmem:[#allocation3 + $0x4e0] sm:$0xff]
        %v1079 = vld [vmem:[#allocation3 + $0x4e8] sm:$0xff]
        %v1080 = vld [vmem:[#allocation3 + $0x4f0] sm:$0xff]
        %v1081 = vld [vmem:[#allocation3 + $0x4f8] sm:$0xff]
        %v1082 = vld [vmem:[#allocation3 + $0x500] sm:$0xff]
        %v1083 = vld [vmem:[#allocation3 + $0x508] sm:$0xff]
        %v1084 = vld [vmem:[#allocation3 + $0x510] sm:$0xff]
        %v1085 = vld [vmem:[#allocation3 + $0x518] sm:$0xff]
        %v1086 = vld [vmem:[#allocation3 + $0x520] sm:$0xff]
        %v1087 = vld [vmem:[#allocation3 + $0x528] sm:$0xff]
        %v1088 = vld [vmem:[#allocation3 + $0x530] sm:$0xff]
        %v1089 = vld [vmem:[#allocation3 + $0x538] sm:$0xff]
        %v1090 = vld [vmem:[#allocation3 + $0x540] sm:$0xff]
        %v1091 = vld [vmem:[#allocation3 + $0x548] sm:$0xff]
        %v1092 = vld [vmem:[#allocation3 + $0x550] sm:$0xff]
        %v1093 = vld [vmem:[#allocation3 + $0x558] sm:$0xff]
        %v1094 = vld [vmem:[#allocation3 + $0x560] sm:$0xff]
        %v1095 = vld [vmem:[#allocation3 + $0x568] sm:$0xff]
        %v1096 = vld [vmem:[#allocation3 + $0x570] sm:$0xff]
        %v1097 = vld [vmem:[#allocation3 + $0x578] sm:$0xff]
        %v1098 = vld [vmem:[#allocation3 + $0x580] sm:$0xff]
        %v1099 = vld [vmem:[#allocation3 + $0x588] sm:$0xff]
        %v1100 = vld [vmem:[#allocation3 + $0x590] sm:$0xff]
        %v1101 = vld [vmem:[#allocation3 + $0x598] sm:$0xff]
        %v1102 = vld [vmem:[#allocation3 + $0x5a0] sm:$0xff]
        %v1103 = vld [vmem:[#allocation3 + $0x5a8] sm:$0xff]
        %v1104 = vld [vmem:[#allocation3 + $0x5b0] sm:$0xff]
        %v1105 = vld [vmem:[#allocation3 + $0x5b8] sm:$0xff]
        %v1106 = vld [vmem:[#allocation3 + $0x5c0] sm:$0xff]
        %v1107 = vld [vmem:[#allocation3 + $0x5c8] sm:$0xff]
        %v1108 = vld [vmem:[#allocation3 + $0x5d0] sm:$0xff]
        %v1109 = vld [vmem:[#allocation3 + $0x5d8] sm:$0xff]
        %v1110 = vld [vmem:[#allocation3 + $0x5e0] sm:$0xff]
        %v1111 = vld [vmem:[#allocation3 + $0x5e8] sm:$0xff]
        %v1112 = vld [vmem:[#allocation3 + $0x5f0] sm:$0xff]
        %v1113 = vld [vmem:[#allocation3 + $0x5f8] sm:$0xff]
        %v1114 = vld [vmem:[#allocation3 + $0x600] sm:$0xff]
        %v1115 = vld [vmem:[#allocation3 + $0x608] sm:$0xff]
        %v1116 = vld [vmem:[#allocation3 + $0x610] sm:$0xff]
        %v1117 = vld [vmem:[#allocation3 + $0x618] sm:$0xff]
        %v1118 = vld [vmem:[#allocation3 + $0x620] sm:$0xff]
        %v1119 = vld [vmem:[#allocation3 + $0x628] sm:$0xff]
        %v1120 = vld [vmem:[#allocation3 + $0x630] sm:$0xff]
        %v1121 = vld [vmem:[#allocation3 + $0x638] sm:$0xff]
        %v1122 = vld [vmem:[#allocation3 + $0x640] sm:$0xff]
        %v1123 = vld [vmem:[#allocation3 + $0x648] sm:$0xff]
        %v1124 = vld [vmem:[#allocation3 + $0x650] sm:$0xff]
        %v1125 = vld [vmem:[#allocation3 + $0x658] sm:$0xff]
        %v1126 = vld [vmem:[#allocation3 + $0x660] sm:$0xff]
        %v1127 = vld [vmem:[#allocation3 + $0x668] sm:$0xff]
        %v1128 = vld [vmem:[#allocation3 + $0x670] sm:$0xff]
        %v1129 = vld [vmem:[#allocation3 + $0x678] sm:$0xff]
        %v1130 = vld [vmem:[#allocation3 + $0x680] sm:$0xff]
        %v1131 = vld [vmem:[#allocation3 + $0x688] sm:$0xff]
        %v1132 = vld [vmem:[#allocation3 + $0x690] sm:$0xff]
        %v1133 = vld [vmem:[#allocation3 + $0x698] sm:$0xff]
        %v1134 = vld [vmem:[#allocation3 + $0x6a0] sm:$0xff]
        %v1135 = vld [vmem:[#allocation3 + $0x6a8] sm:$0xff]
        %v1136 = vld [vmem:[#allocation3 + $0x6b0] sm:$0xff]
        %v1137 = vld [vmem:[#allocation3 + $0x6b8] sm:$0xff]
        %v1138 = vld [vmem:[#allocation3 + $0x6c0] sm:$0xff]
        %v1139 = vld [vmem:[#allocation3 + $0x6c8] sm:$0xff]
        %v1140 = vld [vmem:[#allocation3 + $0x6d0] sm:$0xff]
        %v1141 = vld [vmem:[#allocation3 + $0x6d8] sm:$0xff]
        %v1142 = vld [vmem:[#allocation3 + $0x6e0] sm:$0xff]
        %v1143 = vld [vmem:[#allocation3 + $0x6e8] sm:$0xff]
        %v1144 = vld [vmem:[#allocation3 + $0x6f0] sm:$0xff]
        %v1145 = vld [vmem:[#allocation3 + $0x6f8] sm:$0xff]
        %v1146 = vld [vmem:[#allocation3 + $0x700] sm:$0xff]
        %v1147 = vld [vmem:[#allocation3 + $0x708] sm:$0xff]
        %v1148 = vld [vmem:[#allocation3 + $0x710] sm:$0xff]
        %v1149 = vld [vmem:[#allocation3 + $0x718] sm:$0xff]
        %v1150 = vld [vmem:[#allocation3 + $0x720] sm:$0xff]
        %v1151 = vld [vmem:[#allocation3 + $0x728] sm:$0xff]
        %v1152 = vld [vmem:[#allocation3 + $0x730] sm:$0xff]
        %v1153 = vld [vmem:[#allocation3 + $0x738] sm:$0xff]
        %v1154 = vld [vmem:[#allocation3 + $0x740] sm:$0xff]
        %v1155 = vld [vmem:[#allocation3 + $0x748] sm:$0xff]
        %v1156 = vld [vmem:[#allocation3 + $0x750] sm:$0xff]
        %v1157 = vld [vmem:[#allocation3 + $0x758] sm:$0xff]
        %v1158 = vld [vmem:[#allocation3 + $0x760] sm:$0xff]
        %v1159 = vld [vmem:[#allocation3 + $0x768] sm:$0xff]
        %v1160 = vld [vmem:[#allocation3 + $0x770] sm:$0xff]
        %v1161 = vld [vmem:[#allocation3 + $0x778] sm:$0xff]
        %v1162 = vld [vmem:[#allocation3 + $0x780] sm:$0xff]
        %v1163 = vld [vmem:[#allocation3 + $0x788] sm:$0xff]
        %v1164 = vld [vmem:[#allocation3 + $0x790] sm:$0xff]
        %v1165 = vld [vmem:[#allocation3 + $0x798] sm:$0xff]
        %v1166 = vld [vmem:[#allocation3 + $0x7a0] sm:$0xff]
        %v1167 = vld [vmem:[#allocation3 + $0x7a8] sm:$0xff]
        %v1168 = vld [vmem:[#allocation3 + $0x7b0] sm:$0xff]
        %v1169 = vld [vmem:[#allocation3 + $0x7b8] sm:$0xff]
        %v1170 = vld [vmem:[#allocation3 + $0x7c0] sm:$0xff]
        %v1171 = vld [vmem:[#allocation3 + $0x7c8] sm:$0xff]
        %v1172 = vld [vmem:[#allocation3 + $0x7d0] sm:$0xff]
        %v1173 = vld [vmem:[#allocation3 + $0x7d8] sm:$0xff]
        %v1174 = vld [vmem:[#allocation3 + $0x7e0] sm:$0xff]
        %v1175 = vld [vmem:[#allocation3 + $0x7e8] sm:$0xff]
        %v1176 = vld [vmem:[#allocation3 + $0x7f0] sm:$0xff]
        %v1177 = vld [vmem:[#allocation3 + $0x7f8] sm:$0xff]
        %v1179 = vcombine.high %v921, %v921
        %1181 = vmatprep.subr.mxu0 %v923
        %1182 = vmatpush1.msra.mxu0 %v922
        %1183 = vmatprep.subr.mxu0 %v931
        %1184 = vmatpush1.msra.mxu0 %v930
        %1185 = vmatprep.subr.mxu0 %v939
        %1186 = vmatpush1.msra.mxu0 %v938
        %1187 = vmatprep.subr.mxu0 %v947
        %1188 = vmatpush1.msra.mxu0 %v946
        %1189 = vmatprep.subr.mxu0 %v955
        %1190 = vmatpush1.msra.mxu0 %v954
        %1191 = vmatprep.subr.mxu0 %v963
        %1192 = vmatpush1.msra.mxu0 %v962
        %1193 = vmatprep.subr.mxu0 %v971
        %1194 = vmatpush1.msra.mxu0 %v970
        %1195 = vmatprep.subr.mxu0 %v979
        %1196 = vmatpush1.msra.mxu0 %v978
        %1197 = vmatprep.subr.mxu0 %v987
        %1198 = vmatpush1.msra.mxu0 %v986
        %1199 = vmatprep.subr.mxu0 %v995
        %1200 = vmatpush1.msra.mxu0 %v994
        %1201 = vmatprep.subr.mxu0 %v1003
        %1202 = vmatpush1.msra.mxu0 %v1002
        %1203 = vmatprep.subr.mxu0 %v1011
        %1204 = vmatpush1.msra.mxu0 %v1010
        %1205 = vmatprep.subr.mxu0 %v1019
        %1206 = vmatpush1.msra.mxu0 %v1018
        %1207 = vmatprep.subr.mxu0 %v1027
        %1208 = vmatpush1.msra.mxu0 %v1026
        %1209 = vmatprep.subr.mxu0 %v1035
        %1210 = vmatpush1.msra.mxu0 %v1034
        %1211 = vmatprep.subr.mxu0 %v1043
        %1212 = vmatpush1.msra.mxu0 %v1042
        %1213 = vmatprep.subr.mxu0 %v1051
        %1214 = vmatpush1.msra.mxu0 %v1050
        %1215 = vmatprep.subr.mxu0 %v1059
        %1216 = vmatpush1.msra.mxu0 %v1058
        %1217 = vmatprep.subr.mxu0 %v1067
        %1218 = vmatpush1.msra.mxu0 %v1066
        %1219 = vmatprep.subr.mxu0 %v1075
        %1220 = vmatpush1.msra.mxu0 %v1074
        %1221 = vmatprep.subr.mxu0 %v1083
        %1222 = vmatpush1.msra.mxu0 %v1082
        %1223 = vmatprep.subr.mxu0 %v1091
        %1224 = vmatpush1.msra.mxu0 %v1090
        %1225 = vmatprep.subr.mxu0 %v1099
        %1226 = vmatpush1.msra.mxu0 %v1098
        %1227 = vmatprep.subr.mxu0 %v1107
        %1228 = vmatpush1.msra.mxu0 %v1106
        %1229 = vmatprep.subr.mxu0 %v1115
        %1230 = vmatpush1.msra.mxu0 %v1114
        %1231 = vmatprep.subr.mxu0 %v1123
        %1232 = vmatpush1.msra.mxu0 %v1122
        %1233 = vmatprep.subr.mxu0 %v1131
        %1234 = vmatpush1.msra.mxu0 %v1130
        %1235 = vmatprep.subr.mxu0 %v1139
        %1236 = vmatpush1.msra.mxu0 %v1138
        %1237 = vmatprep.subr.mxu0 %v1147
        %1238 = vmatpush1.msra.mxu0 %v1146
        %1239 = vmatprep.subr.mxu0 %v1155
        %1240 = vmatpush1.msra.mxu0 %v1154
        %1241 = vmatprep.subr.mxu0 %v1163
        %1242 = vmatpush1.msra.mxu0 %v1162
        %1243 = vmatprep.subr.mxu0 %v1171
        %1244 = vmatpush1.msra.mxu0 %v1170
        %1245 = vmatprep.mubr.f32.mxu0 %v1179
        %1246 = vmatmul.mubr.f32.gmra.mrb[0].mxu0 %v921
        %v1247 = vpop.f32.mrb[0].mxu0
        %v1248 = vadd.f32 0.0, %v1247
        %v1249 = vpop.f32.mrb[0].mxu0
        %v1250 = vadd.f32 0.0, %v1249
        %1251 = vdwg.mxu0
        %1252 = vmatprep.subr.mxu0 %v925
        %1253 = vmatpush1.msra.mxu0 %v924
        %1254 = vmatprep.subr.mxu0 %v933
        %1255 = vmatpush1.msra.mxu0 %v932
        %1256 = vmatprep.subr.mxu0 %v941
        %1257 = vmatpush1.msra.mxu0 %v940
        %1258 = vmatprep.subr.mxu0 %v949
        %1259 = vmatpush1.msra.mxu0 %v948
        %1260 = vmatprep.subr.mxu0 %v957
        %1261 = vmatpush1.msra.mxu0 %v956
        %1262 = vmatprep.subr.mxu0 %v965
        %1263 = vmatpush1.msra.mxu0 %v964
        %1264 = vmatprep.subr.mxu0 %v973
        %1265 = vmatpush1.msra.mxu0 %v972
        %1266 = vmatprep.subr.mxu0 %v981
        %1267 = vmatpush1.msra.mxu0 %v980
        %1268 = vmatprep.subr.mxu0 %v989
        %1269 = vmatpush1.msra.mxu0 %v988
        %1270 = vmatprep.subr.mxu0 %v997
        %1271 = vmatpush1.msra.mxu0 %v996
        %1272 = vmatprep.subr.mxu0 %v1005
        %1273 = vmatpush1.msra.mxu0 %v1004
        %1274 = vmatprep.subr.mxu0 %v1013
        %1275 = vmatpush1.msra.mxu0 %v1012
        %1276 = vmatprep.subr.mxu0 %v1021
        %1277 = vmatpush1.msra.mxu0 %v1020
        %1278 = vmatprep.subr.mxu0 %v1029
        %1279 = vmatpush1.msra.mxu0 %v1028
        %1280 = vmatprep.subr.mxu0 %v1037
        %1281 = vmatpush1.msra.mxu0 %v1036
        %1282 = vmatprep.subr.mxu0 %v1045
        %1283 = vmatpush1.msra.mxu0 %v1044
        %1284 = vmatprep.subr.mxu0 %v1053
        %1285 = vmatpush1.msra.mxu0 %v1052
        %1286 = vmatprep.subr.mxu0 %v1061
        %1287 = vmatpush1.msra.mxu0 %v1060
        %1288 = vmatprep.subr.mxu0 %v1069
        %1289 = vmatpush1.msra.mxu0 %v1068
        %1290 = vmatprep.subr.mxu0 %v1077
        %1291 = vmatpush1.msra.mxu0 %v1076
        %1292 = vmatprep.subr.mxu0 %v1085
        %1293 = vmatpush1.msra.mxu0 %v1084
        %1294 = vmatprep.subr.mxu0 %v1093
        %1295 = vmatpush1.msra.mxu0 %v1092
        %1296 = vmatprep.subr.mxu0 %v1101
        %1297 = vmatpush1.msra.mxu0 %v1100
        %1298 = vmatprep.subr.mxu0 %v1109
        %1299 = vmatpush1.msra.mxu0 %v1108
        %1300 = vmatprep.subr.mxu0 %v1117
        %1301 = vmatpush1.msra.mxu0 %v1116
        %1302 = vmatprep.subr.mxu0 %v1125
        %1303 = vmatpush1.msra.mxu0 %v1124
        %1304 = vmatprep.subr.mxu0 %v1133
        %1305 = vmatpush1.msra.mxu0 %v1132
        %1306 = vmatprep.subr.mxu0 %v1141
        %1307 = vmatpush1.msra.mxu0 %v1140
        %1308 = vmatprep.subr.mxu0 %v1149
        %1309 = vmatpush1.msra.mxu0 %v1148
        %1310 = vmatprep.subr.mxu0 %v1157
        %1311 = vmatpush1.msra.mxu0 %v1156
        %1312 = vmatprep.subr.mxu0 %v1165
        %1313 = vmatpush1.msra.mxu0 %v1164
        %1314 = vmatprep.subr.mxu0 %v1173
        %1315 = vmatpush1.msra.mxu0 %v1172
        %1316 = vmatprep.mubr.f32.mxu0 %v1179
        %1317 = vmatmul.mubr.f32.gmra.mrb[0].mxu0 %v921
        %v1318 = vpop.f32.mrb[0].mxu0
        %v1319 = vadd.f32 0.0, %v1318
        %v1320 = vpop.f32.mrb[0].mxu0
        %v1321 = vadd.f32 0.0, %v1320
        %1322 = vdwg.mxu0
        %1323 = vmatprep.subr.mxu0 %v927
        %1324 = vmatpush1.msra.mxu0 %v926
        %1325 = vmatprep.subr.mxu0 %v935
        %1326 = vmatpush1.msra.mxu0 %v934
        %1327 = vmatprep.subr.mxu0 %v943
        %1328 = vmatpush1.msra.mxu0 %v942
        %1329 = vmatprep.subr.mxu0 %v951
        %1330 = vmatpush1.msra.mxu0 %v950
        %1331 = vmatprep.subr.mxu0 %v959
        %1332 = vmatpush1.msra.mxu0 %v958
        %1333 = vmatprep.subr.mxu0 %v967
        %1334 = vmatpush1.msra.mxu0 %v966
        %1335 = vmatprep.subr.mxu0 %v975
        %1336 = vmatpush1.msra.mxu0 %v974
        %1337 = vmatprep.subr.mxu0 %v983
        %1338 = vmatpush1.msra.mxu0 %v982
        %1339 = vmatprep.subr.mxu0 %v991
        %1340 = vmatpush1.msra.mxu0 %v990
        %1341 = vmatprep.subr.mxu0 %v999
        %1342 = vmatpush1.msra.mxu0 %v998
        %1343 = vmatprep.subr.mxu0 %v1007
        %1344 = vmatpush1.msra.mxu0 %v1006
        %1345 = vmatprep.subr.mxu0 %v1015
        %1346 = vmatpush1.msra.mxu0 %v1014
        %1347 = vmatprep.subr.mxu0 %v1023
        %1348 = vmatpush1.msra.mxu0 %v1022
        %1349 = vmatprep.subr.mxu0 %v1031
        %1350 = vmatpush1.msra.mxu0 %v1030
        %1351 = vmatprep.subr.mxu0 %v1039
        %1352 = vmatpush1.msra.mxu0 %v1038
        %1353 = vmatprep.subr.mxu0 %v1047
        %1354 = vmatpush1.msra.mxu0 %v1046
        %1355 = vmatprep.subr.mxu0 %v1055
        %1356 = vmatpush1.msra.mxu0 %v1054
        %1357 = vmatprep.subr.mxu0 %v1063
        %1358 = vmatpush1.msra.mxu0 %v1062
        %1359 = vmatprep.subr.mxu0 %v1071
        %1360 = vmatpush1.msra.mxu0 %v1070
        %1361 = vmatprep.subr.mxu0 %v1079
        %1362 = vmatpush1.msra.mxu0 %v1078
        %1363 = vmatprep.subr.mxu0 %v1087
        %1364 = vmatpush1.msra.mxu0 %v1086
        %1365 = vmatprep.subr.mxu0 %v1095
        %1366 = vmatpush1.msra.mxu0 %v1094
        %1367 = vmatprep.subr.mxu0 %v1103
        %1368 = vmatpush1.msra.mxu0 %v1102
        %1369 = vmatprep.subr.mxu0 %v1111
        %1370 = vmatpush1.msra.mxu0 %v1110
        %1371 = vmatprep.subr.mxu0 %v1119
        %1372 = vmatpush1.msra.mxu0 %v1118
        %1373 = vmatprep.subr.mxu0 %v1127
        %1374 = vmatpush1.msra.mxu0 %v1126
        %1375 = vmatprep.subr.mxu0 %v1135
        %1376 = vmatpush1.msra.mxu0 %v1134
        %1377 = vmatprep.subr.mxu0 %v1143
        %1378 = vmatpush1.msra.mxu0 %v1142
        %1379 = vmatprep.subr.mxu0 %v1151
        %1380 = vmatpush1.msra.mxu0 %v1150
        %1381 = vmatprep.subr.mxu0 %v1159
        %1382 = vmatpush1.msra.mxu0 %v1158
        %1383 = vmatprep.subr.mxu0 %v1167
        %1384 = vmatpush1.msra.mxu0 %v1166
        %1385 = vmatprep.subr.mxu0 %v1175
        %1386 = vmatpush1.msra.mxu0 %v1174
        %1387 = vmatprep.mubr.f32.mxu0 %v1179
        %1388 = vmatmul.mubr.f32.gmra.mrb[0].mxu0 %v921
        %v1389 = vpop.f32.mrb[0].mxu0
        %v1390 = vadd.f32 0.0, %v1389
        %v1391 = vpop.f32.mrb[0].mxu0
        %v1392 = vadd.f32 0.0, %v1391
        %1393 = vdwg.mxu0
        %1394 = vmatprep.subr.mxu0 %v929
        %1395 = vmatpush1.msra.mxu0 %v928
        %1396 = vmatprep.subr.mxu0 %v937
        %1397 = vmatpush1.msra.mxu0 %v936
        %1398 = vmatprep.subr.mxu0 %v945
        %1399 = vmatpush1.msra.mxu0 %v944
        %1400 = vmatprep.subr.mxu0 %v953
        %1401 = vmatpush1.msra.mxu0 %v952
        %1402 = vmatprep.subr.mxu0 %v961
        %1403 = vmatpush1.msra.mxu0 %v960
        %1404 = vmatprep.subr.mxu0 %v969
        %1405 = vmatpush1.msra.mxu0 %v968
        %1406 = vmatprep.subr.mxu0 %v977
        %1407 = vmatpush1.msra.mxu0 %v976
        %1408 = vmatprep.subr.mxu0 %v985
        %1409 = vmatpush1.msra.mxu0 %v984
        %1410 = vmatprep.subr.mxu0 %v993
        %1411 = vmatpush1.msra.mxu0 %v992
        %1412 = vmatprep.subr.mxu0 %v1001
        %1413 = vmatpush1.msra.mxu0 %v1000
        %1414 = vmatprep.subr.mxu0 %v1009
        %1415 = vmatpush1.msra.mxu0 %v1008
        %1416 = vmatprep.subr.mxu0 %v1017
        %1417 = vmatpush1.msra.mxu0 %v1016
        %1418 = vmatprep.subr.mxu0 %v1025
        %1419 = vmatpush1.msra.mxu0 %v1024
        %1420 = vmatprep.subr.mxu0 %v1033
        %1421 = vmatpush1.msra.mxu0 %v1032
        %1422 = vmatprep.subr.mxu0 %v1041
        %1423 = vmatpush1.msra.mxu0 %v1040
        %1424 = vmatprep.subr.mxu0 %v1049
        %1425 = vmatpush1.msra.mxu0 %v1048
        %1426 = vmatprep.subr.mxu0 %v1057
        %1427 = vmatpush1.msra.mxu0 %v1056
        %1428 = vmatprep.subr.mxu0 %v1065
        %1429 = vmatpush1.msra.mxu0 %v1064
        %1430 = vmatprep.subr.mxu0 %v1073
        %1431 = vmatpush1.msra.mxu0 %v1072
        %1432 = vmatprep.subr.mxu0 %v1081
        %1433 = vmatpush1.msra.mxu0 %v1080
        %1434 = vmatprep.subr.mxu0 %v1089
        %1435 = vmatpush1.msra.mxu0 %v1088
        %1436 = vmatprep.subr.mxu0 %v1097
        %1437 = vmatpush1.msra.mxu0 %v1096
        %1438 = vmatprep.subr.mxu0 %v1105
        %1439 = vmatpush1.msra.mxu0 %v1104
        %1440 = vmatprep.subr.mxu0 %v1113
        %1441 = vmatpush1.msra.mxu0 %v1112
        %1442 = vmatprep.subr.mxu0 %v1121
        %1443 = vmatpush1.msra.mxu0 %v1120
        %1444 = vmatprep.subr.mxu0 %v1129
        %1445 = vmatpush1.msra.mxu0 %v1128
        %1446 = vmatprep.subr.mxu0 %v1137
        %1447 = vmatpush1.msra.mxu0 %v1136
        %1448 = vmatprep.subr.mxu0 %v1145
        %1449 = vmatpush1.msra.mxu0 %v1144
        %1450 = vmatprep.subr.mxu0 %v1153
        %1451 = vmatpush1.msra.mxu0 %v1152
        %1452 = vmatprep.subr.mxu0 %v1161
        %1453 = vmatpush1.msra.mxu0 %v1160
        %1454 = vmatprep.subr.mxu0 %v1169
        %1455 = vmatpush1.msra.mxu0 %v1168
        %1456 = vmatprep.subr.mxu0 %v1177
        %1457 = vmatpush1.msra.mxu0 %v1176
        %1458 = vmatprep.mubr.f32.mxu0 %v1179
        %1459 = vmatmul.mubr.f32.gmra.mrb[0].mxu0 %v921
        %v1460 = vpop.f32.mrb[0].mxu0
        %v1461 = vadd.f32 0.0, %v1460
        %v1462 = vpop.f32.mrb[0].mxu0
        %v1463 = vadd.f32 0.0, %v1462
        %1464 = vdwg.mxu0
        %v1473 = vcombine.low %v1248, %v1250
        %v1474 = vcombine.low %v1319, %v1321
        %v1475 = vcombine.low %v1390, %v1392
        %v1476 = vcombine.low %v1461, %v1463
        %1481 = vst [vmem:[%s320] sm:$0xff] %v1473
        %1482 = vst [vmem:[%s320 + $0x8] sm:$0xff] %v1474
        %1483 = vst [vmem:[%s320 + $0x10] sm:$0xff] %v1475
        %1484 = vst [vmem:[%s320 + $0x18] sm:$0xff] %v1476
        %p1485 = scmp.lt.s32.totalorder %s20, 1
        %s1486 = scalar_select %p1485, %s20, 1
        %s1487 = smul.addr %s1486, 8
        %s1488 = smul.addr %s1487, 4
        %s1489 = scalar_lea.vmem %s8, %s1488
        // Predicated region
        $region57: #{feature_decoding_forward.1} parent=51 // pred_check
          %p1490 = pneg %p211
        $region58: #{feature_decoding_forward.1} parent=51 // pred_check_branch
          %1492 = sbr.rel (%p1490) target = $region60
        $region59: #{feature_decoding_forward.1} parent=51 // pred_region
          _
        $region60: #{feature_decoding_forward.1} parent=51 // pred_fallthru
          _
      $region52: #{feature_decoding_forward.1} parent=5 // pred_fallthru
        _
      %p1493 = scmp.le.s32.totalorder 2, %s15
      // Predicated region
      $region61: #{feature_decoding_forward.1} parent=5 // pred_check
        %p1494 = pneg %p1493
      $region62: #{feature_decoding_forward.1} parent=5 // pred_check_branch
        %1496 = sbr.rel (%p1494) target = $region64
      $region63: #{feature_decoding_forward.1} parent=5 // pred_region
        %s1497 = ssub.s32 %s15, 2
        // Predicated region
        $region65: #{feature_decoding_forward.1} parent=63 // pred_check
          %p1498 = pneg %p217
        $region66: #{feature_decoding_forward.1} parent=63 // pred_check_branch
          %1500 = sbr.rel (%p1498) target = $region68
        $region67: #{feature_decoding_forward.1} parent=63 // pred_region
          %p1501 = scmp.lt.s32.totalorder %s21, 1
          %s1502 = scalar_select %p1501, %s21, 1
          %s1503 = smul.addr %s1502, 8
          %s1504 = smul.addr %s1503, 4
          %s1505 = scalar_lea.vmem %s8, %s1504
        $region68: #{feature_decoding_forward.1} parent=63 // pred_fallthru
          _
      $region64: #{feature_decoding_forward.1} parent=5 // pred_fallthru
        _
    $region6: #{feature_decoding_forward.1} parent=1 // loop_footer
      %s19 = sadd.s32 1, %s15
    $region7: #{feature_decoding_forward.1} parent=1 // loop_footer_branch
      %14 = sbr.rel target = $region3
    $region8: #{feature_decoding_forward.1} parent=1 // loop_exit
      _
    %1506 = vsyncpa [#allocation4], 1
    %s1507 = scalar_lea.sflag [#allocation4], 1
    %1508 = vsyncpa %s1507, 1

</llo_original>
